<compile_context>
chip_gen: v7x
topology: tpu7x:2x2x1
jax: 0.10.0
libtpu: 0.0.40
codegen_flags: <defaults>
</compile_context>

<pallas_src>
import functools
import math

import jax
import jax.numpy as jnp
from jax.experimental import pallas as pl
from jax.experimental.pallas import tpu as pltpu

BN_EPS = 1e-5


# -----------------------------------------------------------------------------
# Pass 1: both convolutions (bf16 MXU, f32 accumulation) + BN batch statistics.
# -----------------------------------------------------------------------------
def _pass1_kernel(xps_ref, x2_ref, wA_ref, wB_ref,
                  yA_ref, yB_ref, sumA_ref, sqA_ref, sumB_ref, sqB_ref):
    n = pl.program_id(0)
    j = pl.program_id(1)

    @pl.when(jnp.logical_and(n == 0, j == 0))
    def _init():
        sumA_ref[...] = jnp.zeros_like(sumA_ref)
        sqA_ref[...] = jnp.zeros_like(sqA_ref)
        sumB_ref[...] = jnp.zeros_like(sumB_ref)
        sqB_ref[...] = jnp.zeros_like(sqB_ref)

    tm, ca = yA_ref.shape
    k = xps_ref.shape[3]          # 4 * C1 (space-to-depth channels)
    wo = xps_ref.shape[2] - 1     # output width (padded s2d width - 1)
    th = tm // wo                 # output rows handled by this block
    ho0 = j * th

    # --- Branch A: Conv2d(32->64, k=3, s=2, p=1) on X1, fused im2col ----------
    # Equivalent 2x2/stride-1 conv over the top/left-padded space-to-depth view:
    # 4 shifted, unit-stride dots with K = 128 (full MXU depth).
    acc_a = jnp.zeros((tm, ca), jnp.float32)
    for ao in range(2):
        for bo in range(2):
            xs = xps_ref[0, pl.ds(ho0 + ao, th), pl.ds(bo, wo), :]
            xs = xs.reshape(tm, k).astype(jnp.bfloat16)
            acc_a = acc_a + jnp.dot(xs, wA_ref[ao, bo],
                                    preferred_element_type=jnp.float32)
    yA_ref[...] = acc_a

    # --- Branch B: Conv2d(64->32, k=1, s=1) on X2 = plain channel matmul ------
    x2 = x2_ref[...].astype(jnp.bfloat16)
    acc_b = jnp.dot(x2, wB_ref[...], preferred_element_type=jnp.float32)
    yB_ref[...] = acc_b

    # --- BatchNorm batch statistics: sum and sum-of-squares in one sweep ------
    sumA_ref[...] += jnp.sum(acc_a, axis=0, keepdims=True)
    sqA_ref[...] += jnp.sum(acc_a * acc_a, axis=0, keepdims=True)
    sumB_ref[...] += jnp.sum(acc_b, axis=0, keepdims=True)
    sqB_ref[...] += jnp.sum(acc_b * acc_b, axis=0, keepdims=True)


# -----------------------------------------------------------------------------
# Pass 2: normalize + gamma/beta + skip add + nearest 2x upsample + ReLU.
# -----------------------------------------------------------------------------
def _pass2_kernel(yA_ref, yB_ref, x2_ref, x1s_ref,
                  sumA_ref, sqA_ref, sumB_ref, sqB_ref,
                  gA_ref, bA_ref, gB_ref, bB_ref,
                  out2_ref, out1_ref, *, inv_m):
    # Per-channel affine from batch statistics (biased variance, PyTorch BN).
    mean_a = sumA_ref[...] * inv_m
    var_a = sqA_ref[...] * inv_m - mean_a * mean_a
    scale_a = gA_ref[...] * jax.lax.rsqrt(var_a + BN_EPS)
    shift_a = bA_ref[...] - mean_a * scale_a

    mean_b = sumB_ref[...] * inv_m
    var_b = sqB_ref[...] * inv_m - mean_b * mean_b
    scale_b = gB_ref[...] * jax.lax.rsqrt(var_b + BN_EPS)
    shift_b = bB_ref[...] - mean_b * scale_b

    # out2 = ReLU(BN(convA(X1)) + X2)          (low resolution, 64 channels)
    a = yA_ref[...] * scale_a + shift_a + x2_ref[...]
    out2_ref[...] = jnp.maximum(a, 0.0)

    # out1 = ReLU(up2x(BN(convB(X2))) + X1)    (high resolution, 32 channels)
    # In the space-to-depth layout the nearest 2x upsample is a channel tile.
    z = yB_ref[...] * scale_b + shift_b
    z_up = jnp.concatenate([z, z, z, z], axis=-1)
    out1_ref[...] = jnp.maximum(z_up + x1s_ref[...], 0.0)


def _row_tile(ho, wo, target_rows=1024):
    """Largest divisor `th` of `ho` with th * wo <= target_rows (at least 1)."""
    th = 1
    for cand in range(1, ho + 1):
        if ho % cand == 0 and cand * wo <= target_rows:
            th = cand
    return th


def stage2_fusion_forward(X1, X2, params):
    """X1: (N, 32, H, W), X2: (N, 64, H//2, W//2), NCHW float32.

    Returns (out1, out2) in NCHW, matching Stage2Fusion.forward (training-mode BN).
    """
    n, c1, h, w = X1.shape
    n2, c2, ho, wo = X2.shape
    assert n == n2 and h == 2 * ho and w == 2 * wo
    assert params["w1"].shape == (c2, c1, 3, 3)

    # ---- Layout plumbing (one transpose per tensor, no im2col inflation) -----
    # X1 -> space-to-depth, channels-last: (N, Ho, Wo, 4*C1), channel = (dh, dw, ci).
    x1s = (X1.reshape(n, c1, ho, 2, wo, 2)
             .transpose(0, 2, 4, 3, 5, 1)
             .reshape(n, ho, wo, 4 * c1).astype(jnp.float32))
    # Top/left pad by one s2d cell => the 3x3/s2/p1 conv becomes a valid 2x2/s1 conv.
    xps = jnp.pad(x1s, ((0, 0), (1, 0), (1, 0), (0, 0)))
    x1s_flat = x1s.reshape(n * ho * wo, 4 * c1)

    # X2 -> channels-last, flattened rows (used by both passes).
    x2_flat = (jnp.transpose(X2, (0, 2, 3, 1))
                  .reshape(n * ho * wo, c2).astype(jnp.float32))

    # ---- Weights (bf16 for the MXU; biases dropped, they cancel under BN) ----
    wt = jnp.transpose(params["w1"], (2, 3, 1, 0))             # (3, 3, C1, C2)
    wp = jnp.pad(wt, ((1, 0), (1, 0), (0, 0), (0, 0)))         # (4, 4, C1, C2)
    wA = (wp.reshape(2, 2, 2, 2, c1, c2)
            .transpose(0, 2, 1, 3, 4, 5)
            .reshape(2, 2, 4 * c1, c2).astype(jnp.bfloat16))   # (2, 2, 4*C1, C2)
    wB = jnp.transpose(params["w2"].reshape(c1, c2), (1, 0)).astype(jnp.bfloat16)

    gA = params["gamma1"].reshape(1, c2).astype(jnp.float32)
    bA = params["beta1"].reshape(1, c2).astype(jnp.float32)
    gB = params["gamma2"].reshape(1, c1).astype(jnp.float32)
    bB = params["beta2"].reshape(1, c1).astype(jnp.float32)

    m = n * ho * wo
    th = _row_tile(ho, wo)
    njb = ho // th
    tm = th * wo
    k4 = 4 * c1

    row_map = lambda i, j: (i * njb + j, 0)
    full2 = lambda i, j: (0, 0)

    # ---- Pass 1: convs + BN statistics ---------------------------------------
    cost1 = pl.CostEstimate(
        flops=2 * m * k4 * c2 * 4 + 2 * m * c2 * c1,
        transcendentals=0,
        bytes_accessed=int(4 * (xps.size + x2_flat.size + m * c2 + m * c1)
                           + 2 * (wA.size + wB.size)),
    )
    yA, yB, sumA, sqA, sumB, sqB = pl.pallas_call(
        _pass1_kernel,
        grid=(n, njb),
        in_specs=[
            pl.BlockSpec((1, ho + 1, wo + 1, k4), lambda i, j: (i, 0, 0, 0)),
            pl.BlockSpec((tm, c2), row_map),
            pl.BlockSpec((2, 2, k4, c2), lambda i, j: (0, 0, 0, 0)),
            pl.BlockSpec((c2, c1), full2),
        ],
        out_specs=[
            pl.BlockSpec((tm, c2), row_map),      # yA (conv3x3 output rows)
            pl.BlockSpec((tm, c1), row_map),      # yB (conv1x1 output rows)
            pl.BlockSpec((1, c2), full2),         # sum  A (resident accumulator)
            pl.BlockSpec((1, c2), full2),         # sum2 A
            pl.BlockSpec((1, c1), full2),         # sum  B
            pl.BlockSpec((1, c1), full2),         # sum2 B
        ],
        out_shape=(
            jax.ShapeDtypeStruct((m, c2), jnp.float32),
            jax.ShapeDtypeStruct((m, c1), jnp.float32),
            jax.ShapeDtypeStruct((1, c2), jnp.float32),
            jax.ShapeDtypeStruct((1, c2), jnp.float32),
            jax.ShapeDtypeStruct((1, c1), jnp.float32),
            jax.ShapeDtypeStruct((1, c1), jnp.float32),
        ),
        compiler_params=pltpu.CompilerParams(
            dimension_semantics=("arbitrary", "arbitrary")),
        cost_estimate=cost1,
    )(xps, x2_flat, wA, wB)

    # ---- Pass 2: normalize + skip + upsample + ReLU (fully parallel) ---------
    row1 = lambda i: (i, 0)
    full1 = lambda i: (0, 0)
    out2_flat, out1_flat = pl.pallas_call(
        functools.partial(_pass2_kernel, inv_m=1.0 / m),
        grid=(m // tm,),
        in_specs=[
            pl.BlockSpec((tm, c2), row1),     # yA
            pl.BlockSpec((tm, c1), row1),     # yB
            pl.BlockSpec((tm, c2), row1),     # X2 skip
            pl.BlockSpec((tm, k4), row1),     # X1 skip (space-to-depth)
            pl.BlockSpec((1, c2), full1),     # sumA
            pl.BlockSpec((1, c2), full1),     # sqA
            pl.BlockSpec((1, c1), full1),     # sumB
            pl.BlockSpec((1, c1), full1),     # sqB
            pl.BlockSpec((1, c2), full1),     # gamma1
            pl.BlockSpec((1, c2), full1),     # beta1
            pl.BlockSpec((1, c1), full1),     # gamma2
            pl.BlockSpec((1, c1), full1),     # beta2
        ],
        out_specs=[
            pl.BlockSpec((tm, c2), row1),     # out2 rows (low res, NHWC)
            pl.BlockSpec((tm, k4), row1),     # out1 rows (space-to-depth, 128 lanes)
        ],
        out_shape=(
            jax.ShapeDtypeStruct((m, c2), jnp.float32),
            jax.ShapeDtypeStruct((m, k4), jnp.float32),
        ),
        compiler_params=pltpu.CompilerParams(
            dimension_semantics=("parallel",)),
    )(yA, yB, x2_flat, x1s_flat, sumA, sqA, sumB, sqB, gA, bA, gB, bB)

    # ---- Back to NCHW (one transpose per output) ------------------------------
    out2 = jnp.transpose(out2_flat.reshape(n, ho, wo, c2), (0, 3, 1, 2))
    out1 = (out1_flat.reshape(n, ho, wo, 2, 2, c1)
                     .transpose(0, 5, 1, 3, 2, 4)
                     .reshape(n, c1, h, w))
    return out1, out2


def init_params(key, c1=32, c2=64):
    """Parameters matching Stage2Fusion.__init__.  Conv biases are omitted: a conv
    bias followed by training-mode (batch-stat) BatchNorm cancels exactly."""
    k1, k2 = jax.random.split(key)
    bound1 = 1.0 / math.sqrt(c1 * 3 * 3)
    w1 = jax.random.uniform(k1, (c2, c1, 3, 3), jnp.float32, -bound1, bound1)
    bound2 = 1.0 / math.sqrt(c2 * 1 * 1)
    w2 = jax.random.uniform(k2, (c1, c2, 1, 1), jnp.float32, -bound2, bound2)
    return {
        "w1": w1,
        "gamma1": jnp.ones((c2,), jnp.float32),
        "beta1": jnp.zeros((c2,), jnp.float32),
        "w2": w2,
        "gamma2": jnp.ones((c1,), jnp.float32),
        "beta2": jnp.zeros((c1,), jnp.float32),
    }


def reference_forward(X1, X2, params):
    """Pure-JAX f32 reference with identical forward semantics (for validation)."""
    def bn(y, g, b):
        mean = jnp.mean(y, axis=(0, 2, 3), keepdims=True)
        var = jnp.mean(jnp.square(y - mean), axis=(0, 2, 3), keepdims=True)
        return ((y - mean) * jax.lax.rsqrt(var + BN_EPS) * g.reshape(1, -1, 1, 1)
                + b.reshape(1, -1, 1, 1))

    yA = jax.lax.conv_general_dilated(
        X1, params["w1"], window_strides=(2, 2), padding=((1, 1), (1, 1)),
        dimension_numbers=("NCHW", "OIHW", "NCHW"))
    yB = jax.lax.conv_general_dilated(
        X2, params["w2"], window_strides=(1, 1), padding=((0, 0), (0, 0)),
        dimension_numbers=("NCHW", "OIHW", "NCHW"))
    zA = bn(yA, params["gamma1"], params["beta1"])
    zB = bn(yB, params["gamma2"], params["beta2"])
    zB_up = jnp.repeat(jnp.repeat(zB, 2, axis=2), 2, axis=3)
    out1 = jnp.maximum(zB_up + X1, 0.0)
    out2 = jnp.maximum(zA + X2, 0.0)
    return out1, out2


if __name__ == "__main__":
    key = jax.random.PRNGKey(0)
    k1, k2, kp = jax.random.split(key, 3)

    # Small HRNet-like two-resolution inputs (NCHW).
    X1 = jax.random.normal(k1, (2, 32, 16, 16), jnp.float32)
    X2 = jax.random.normal(k2, (2, 64, 8, 8), jnp.float32)
    params = init_params(kp)

    fwd = jax.jit(lambda a, b: stage2_fusion_forward(a, b, params))
    out1, out2 = fwd(X1, X2)
    jax.block_until_ready((out1, out2))

    assert out1.shape == (2, 32, 16, 16), out1.shape
    assert out2.shape == (2, 64, 8, 8), out2.shape

    ref1, ref2 = reference_forward(X1, X2, params)
    err1 = float(jnp.max(jnp.abs(out1 - ref1)))
    err2 = float(jnp.max(jnp.abs(out2 - ref2)))
    # bf16 matmul inputs with f32 accumulation -> loose tolerance vs the f32 reference.
    assert err1 < 7.5e-2 and err2 < 7.5e-2, (err1, err2)
    print("KERNEL_OK")
</pallas_src>

<mosaic_0001>
module attributes {stable_mosaic.version = 11 : i64} {
  func.func @_pass1_kernel(%arg0: i32, %arg1: i32, %arg2: memref<1x9x9x128xf32, #tpu.memory_space<vmem>>, %arg3: memref<64x64xf32, #tpu.memory_space<vmem>>, %arg4: memref<2x2x128x64xbf16, #tpu.memory_space<vmem>>, %arg5: memref<64x32xbf16, #tpu.memory_space<vmem>>, %arg6: memref<64x64xf32, #tpu.memory_space<vmem>>, %arg7: memref<64x32xf32, #tpu.memory_space<vmem>>, %arg8: memref<1x64xf32, #tpu.memory_space<vmem>>, %arg9: memref<1x64xf32, #tpu.memory_space<vmem>>, %arg10: memref<1x32xf32, #tpu.memory_space<vmem>>, %arg11: memref<1x32xf32, #tpu.memory_space<vmem>>) attributes {dimension_semantics = [#tpu.dimension_semantics<arbitrary>, #tpu.dimension_semantics<arbitrary>], iteration_bounds = array<i64: 2, 1>, scalar_prefetch = 0 : i64, scratch_operands = 0 : i64, tpu.core_type = #tpu.core_type<tc>, window_params = [{transform_indices = @transform_0, window_bounds = array<i64: 1, 9, 9, 128>}, {transform_indices = @transform_1, window_bounds = array<i64: 64, 64>}, {pipeline_mode = #tpu.pipeline_mode<synchronous>, transform_indices = @transform_2, window_bounds = array<i64: 2, 2, 128, 64>}, {pipeline_mode = #tpu.pipeline_mode<synchronous>, transform_indices = @transform_3, window_bounds = array<i64: 64, 32>}, {transform_indices = @transform_4, window_bounds = array<i64: 64, 64>}, {transform_indices = @transform_5, window_bounds = array<i64: 64, 32>}, {pipeline_mode = #tpu.pipeline_mode<synchronous>, transform_indices = @transform_6, window_bounds = array<i64: 1, 64>}, {pipeline_mode = #tpu.pipeline_mode<synchronous>, transform_indices = @transform_7, window_bounds = array<i64: 1, 64>}, {pipeline_mode = #tpu.pipeline_mode<synchronous>, transform_indices = @transform_8, window_bounds = array<i64: 1, 32>}, {pipeline_mode = #tpu.pipeline_mode<synchronous>, transform_indices = @transform_9, window_bounds = array<i64: 1, 32>}]} {
    %c0_i32 = arith.constant 0 : i32
    %0 = arith.cmpi eq, %arg0, %c0_i32 : i32
    %c0_i32_0 = arith.constant 0 : i32
    %1 = arith.cmpi eq, %arg1, %c0_i32_0 : i32
    %2 = arith.andi %0, %1 : i1
    %3 = arith.extui %2 : i1 to i32
    %c0_i32_1 = arith.constant 0 : i32
    %4 = arith.cmpi ne, %3, %c0_i32_1 : i32
    scf.if %4 {
      %cst_64 = arith.constant 0.000000e+00 : f32
      %75 = vector.broadcast %cst_64 : f32 to vector<1x64xf32>
      %c0_65 = arith.constant 0 : index
      %c0_66 = arith.constant 0 : index
      %76 = vector.load %arg8[%c0_65, %c0_66] : memref<1x64xf32, #tpu.memory_space<vmem>>, vector<1x64xf32>
      tpu.vector_store %arg8[%c0_65, %c0_66], %75 {strides = array<i32>} : memref<1x64xf32, #tpu.memory_space<vmem>>, vector<1x64xf32>,
      %cst_67 = arith.constant 0.000000e+00 : f32
      %77 = vector.broadcast %cst_67 : f32 to vector<1x64xf32>
      %c0_68 = arith.constant 0 : index
      %c0_69 = arith.constant 0 : index
      %78 = vector.load %arg9[%c0_68, %c0_69] : memref<1x64xf32, #tpu.memory_space<vmem>>, vector<1x64xf32>
      tpu.vector_store %arg9[%c0_68, %c0_69], %77 {strides = array<i32>} : memref<1x64xf32, #tpu.memory_space<vmem>>, vector<1x64xf32>,
      %cst_70 = arith.constant 0.000000e+00 : f32
      %79 = vector.broadcast %cst_70 : f32 to vector<1x32xf32>
      %c0_71 = arith.constant 0 : index
      %c0_72 = arith.constant 0 : index
      %80 = vector.load %arg10[%c0_71, %c0_72] : memref<1x32xf32, #tpu.memory_space<vmem>>, vector<1x32xf32>
      tpu.vector_store %arg10[%c0_71, %c0_72], %79 {strides = array<i32>} : memref<1x32xf32, #tpu.memory_space<vmem>>, vector<1x32xf32>,
      %cst_73 = arith.constant 0.000000e+00 : f32
      %81 = vector.broadcast %cst_73 : f32 to vector<1x32xf32>
      %c0_74 = arith.constant 0 : index
      %c0_75 = arith.constant 0 : index
      %82 = vector.load %arg11[%c0_74, %c0_75] : memref<1x32xf32, #tpu.memory_space<vmem>>, vector<1x32xf32>
      tpu.vector_store %arg11[%c0_74, %c0_75], %81 {strides = array<i32>} : memref<1x32xf32, #tpu.memory_space<vmem>>, vector<1x32xf32>,
    } else {
    }
    %c8_i32 = arith.constant 8 : i32
    %5 = arith.muli %arg1, %c8_i32 : i32
    %cst = arith.constant 0.000000e+00 : f32
    %6 = vector.broadcast %cst : f32 to vector<64x64xf32>
    %c0_i32_2 = arith.constant 0 : i32
    %7 = arith.addi %5, %c0_i32_2 : i32
    %c0 = arith.constant 0 : index
    %8 = arith.index_cast %7 : i32 to index
    %c0_3 = arith.constant 0 : index
    %c0_4 = arith.constant 0 : index
    %9 = vector.load %arg2[%c0, %8, %c0_3, %c0_4] : memref<1x9x9x128xf32, #tpu.memory_space<vmem>>, vector<1x8x8x128xf32>
    %10 = vector.shape_cast %9 : vector<1x8x8x128xf32> to vector<8x8x128xf32>
    %11 = vector.shape_cast %10 : vector<8x8x128xf32> to vector<64x128xf32>
    %12 = arith.truncf %11 : vector<64x128xf32> to vector<64x128xbf16>
    %c0_5 = arith.constant 0 : index
    %c0_6 = arith.constant 0 : index
    %c0_7 = arith.constant 0 : index
    %c0_8 = arith.constant 0 : index
    %13 = vector.load %arg4[%c0_5, %c0_6, %c0_7, %c0_8] : memref<2x2x128x64xbf16, #tpu.memory_space<vmem>>, vector<1x1x128x64xbf16>
    %14 = vector.shape_cast %13 : vector<1x1x128x64xbf16> to vector<128x64xbf16>
    %cst_9 = arith.constant dense<0.000000e+00> : vector<64x64xf32>
    %15 = tpu.matmul %12, %14, %cst_9 {dimension_numbers = #tpu.dot_dimension_numbers<[1], [0], [0], [1], [0, 0, 1, 1], [], []>} : vector<64x128xbf16>, vector<128x64xbf16>, vector<64x64xf32> -> vector<64x64xf32>
    %16 = arith.addf %6, %15 : vector<64x64xf32>
    %c0_i32_10 = arith.constant 0 : i32
    %17 = arith.addi %5, %c0_i32_10 : i32
    %c0_11 = arith.constant 0 : index
    %18 = arith.index_cast %17 : i32 to index
    %c1 = arith.constant 1 : index
    %c0_12 = arith.constant 0 : index
    %19 = vector.load %arg2[%c0_11, %18, %c1, %c0_12] : memref<1x9x9x128xf32, #tpu.memory_space<vmem>>, vector<1x8x8x128xf32>
    %20 = vector.shape_cast %19 : vector<1x8x8x128xf32> to vector<8x8x128xf32>
    %21 = vector.shape_cast %20 : vector<8x8x128xf32> to vector<64x128xf32>
    %22 = arith.truncf %21 : vector<64x128xf32> to vector<64x128xbf16>
    %c0_13 = arith.constant 0 : index
    %c1_14 = arith.constant 1 : index
    %c0_15 = arith.constant 0 : index
    %c0_16 = arith.constant 0 : index
    %23 = vector.load %arg4[%c0_13, %c1_14, %c0_15, %c0_16] : memref<2x2x128x64xbf16, #tpu.memory_space<vmem>>, vector<1x1x128x64xbf16>
    %24 = vector.shape_cast %23 : vector<1x1x128x64xbf16> to vector<128x64xbf16>
    %cst_17 = arith.constant dense<0.000000e+00> : vector<64x64xf32>
    %25 = tpu.matmul %22, %24, %cst_17 {dimension_numbers = #tpu.dot_dimension_numbers<[1], [0], [0], [1], [0, 0, 1, 1], [], []>} : vector<64x128xbf16>, vector<128x64xbf16>, vector<64x64xf32> -> vector<64x64xf32>
    %26 = arith.addf %16, %25 : vector<64x64xf32>
    %c1_i32 = arith.constant 1 : i32
    %27 = arith.addi %5, %c1_i32 : i32
    %c0_18 = arith.constant 0 : index
    %28 = arith.index_cast %27 : i32 to index
    %c0_19 = arith.constant 0 : index
    %c0_20 = arith.constant 0 : index
    %29 = vector.load %arg2[%c0_18, %28, %c0_19, %c0_20] : memref<1x9x9x128xf32, #tpu.memory_space<vmem>>, vector<1x8x8x128xf32>
    %30 = vector.shape_cast %29 : vector<1x8x8x128xf32> to vector<8x8x128xf32>
    %31 = vector.shape_cast %30 : vector<8x8x128xf32> to vector<64x128xf32>
    %32 = arith.truncf %31 : vector<64x128xf32> to vector<64x128xbf16>
    %c1_21 = arith.constant 1 : index
    %c0_22 = arith.constant 0 : index
    %c0_23 = arith.constant 0 : index
    %c0_24 = arith.constant 0 : index
    %33 = vector.load %arg4[%c1_21, %c0_22, %c0_23, %c0_24] : memref<2x2x128x64xbf16, #tpu.memory_space<vmem>>, vector<1x1x128x64xbf16>
    %34 = vector.shape_cast %33 : vector<1x1x128x64xbf16> to vector<128x64xbf16>
    %cst_25 = arith.constant dense<0.000000e+00> : vector<64x64xf32>
    %35 = tpu.matmul %32, %34, %cst_25 {dimension_numbers = #tpu.dot_dimension_numbers<[1], [0], [0], [1], [0, 0, 1, 1], [], []>} : vector<64x128xbf16>, vector<128x64xbf16>, vector<64x64xf32> -> vector<64x64xf32>
    %36 = arith.addf %26, %35 : vector<64x64xf32>
    %c1_i32_26 = arith.constant 1 : i32
    %37 = arith.addi %5, %c1_i32_26 : i32
    %c0_27 = arith.constant 0 : index
    %38 = arith.index_cast %37 : i32 to index
    %c1_28 = arith.constant 1 : index
    %c0_29 = arith.constant 0 : index
    %39 = vector.load %arg2[%c0_27, %38, %c1_28, %c0_29] : memref<1x9x9x128xf32, #tpu.memory_space<vmem>>, vector<1x8x8x128xf32>
    %40 = vector.shape_cast %39 : vector<1x8x8x128xf32> to vector<8x8x128xf32>
    %41 = vector.shape_cast %40 : vector<8x8x128xf32> to vector<64x128xf32>
    %42 = arith.truncf %41 : vector<64x128xf32> to vector<64x128xbf16>
    %c1_30 = arith.constant 1 : index
    %c1_31 = arith.constant 1 : index
    %c0_32 = arith.constant 0 : index
    %c0_33 = arith.constant 0 : index
    %43 = vector.load %arg4[%c1_30, %c1_31, %c0_32, %c0_33] : memref<2x2x128x64xbf16, #tpu.memory_space<vmem>>, vector<1x1x128x64xbf16>
    %44 = vector.shape_cast %43 : vector<1x1x128x64xbf16> to vector<128x64xbf16>
    %cst_34 = arith.constant dense<0.000000e+00> : vector<64x64xf32>
    %45 = tpu.matmul %42, %44, %cst_34 {dimension_numbers = #tpu.dot_dimension_numbers<[1], [0], [0], [1], [0, 0, 1, 1], [], []>} : vector<64x128xbf16>, vector<128x64xbf16>, vector<64x64xf32> -> vector<64x64xf32>
    %46 = arith.addf %36, %45 : vector<64x64xf32>
    %c0_35 = arith.constant 0 : index
    %c0_36 = arith.constant 0 : index
    %47 = vector.load %arg6[%c0_35, %c0_36] : memref<64x64xf32, #tpu.memory_space<vmem>>, vector<64x64xf32>
    tpu.vector_store %arg6[%c0_35, %c0_36], %46 {strides = array<i32>} : memref<64x64xf32, #tpu.memory_space<vmem>>, vector<64x64xf32>,
    %c0_37 = arith.constant 0 : index
    %c0_38 = arith.constant 0 : index
    %48 = vector.load %arg3[%c0_37, %c0_38] : memref<64x64xf32, #tpu.memory_space<vmem>>, vector<64x64xf32>
    %49 = arith.truncf %48 : vector<64x64xf32> to vector<64x64xbf16>
    %c0_39 = arith.constant 0 : index
    %c0_40 = arith.constant 0 : index
    %50 = vector.load %arg5[%c0_39, %c0_40] : memref<64x32xbf16, #tpu.memory_space<vmem>>, vector<64x32xbf16>
    %cst_41 = arith.constant dense<0.000000e+00> : vector<64x32xf32>
    %51 = tpu.matmul %49, %50, %cst_41 {dimension_numbers = #tpu.dot_dimension_numbers<[1], [0], [0], [1], [0, 0, 1, 1], [], []>} : vector<64x64xbf16>, vector<64x32xbf16>, vector<64x32xf32> -> vector<64x32xf32>
    %c0_42 = arith.constant 0 : index
    %c0_43 = arith.constant 0 : index
    %52 = vector.load %arg7[%c0_42, %c0_43] : memref<64x32xf32, #tpu.memory_space<vmem>>, vector<64x32xf32>
    tpu.vector_store %arg7[%c0_42, %c0_43], %51 {strides = array<i32>} : memref<64x32xf32, #tpu.memory_space<vmem>>, vector<64x32xf32>,
    %c0_44 = arith.constant 0 : index
    %c0_45 = arith.constant 0 : index
    %53 = vector.load %arg8[%c0_44, %c0_45] : memref<1x64xf32, #tpu.memory_space<vmem>>, vector<1x64xf32>
    %cst_46 = arith.constant dense<0.000000e+00> : vector<64xf32>
    %54 = vector.multi_reduction <add>, %46, %cst_46 [0] : vector<64x64xf32> to vector<64xf32>
    %55 = vector.shape_cast %54 : vector<64xf32> to vector<1x64xf32>
    %56 = arith.addf %53, %55 : vector<1x64xf32>
    %c0_47 = arith.constant 0 : index
    %c0_48 = arith.constant 0 : index
    %57 = vector.load %arg8[%c0_47, %c0_48] : memref<1x64xf32, #tpu.memory_space<vmem>>, vector<1x64xf32>
    tpu.vector_store %arg8[%c0_47, %c0_48], %56 {strides = array<i32>} : memref<1x64xf32, #tpu.memory_space<vmem>>, vector<1x64xf32>,
    %c0_49 = arith.constant 0 : index
    %c0_50 = arith.constant 0 : index
    %58 = vector.load %arg9[%c0_49, %c0_50] : memref<1x64xf32, #tpu.memory_space<vmem>>, vector<1x64xf32>
    %59 = arith.mulf %46, %46 : vector<64x64xf32>
    %cst_51 = arith.constant dense<0.000000e+00> : vector<64xf32>
    %60 = vector.multi_reduction <add>, %59, %cst_51 [0] : vector<64x64xf32> to vector<64xf32>
    %61 = vector.shape_cast %60 : vector<64xf32> to vector<1x64xf32>
    %62 = arith.addf %58, %61 : vector<1x64xf32>
    %c0_52 = arith.constant 0 : index
    %c0_53 = arith.constant 0 : index
    %63 = vector.load %arg9[%c0_52, %c0_53] : memref<1x64xf32, #tpu.memory_space<vmem>>, vector<1x64xf32>
    tpu.vector_store %arg9[%c0_52, %c0_53], %62 {strides = array<i32>} : memref<1x64xf32, #tpu.memory_space<vmem>>, vector<1x64xf32>,
    %c0_54 = arith.constant 0 : index
    %c0_55 = arith.constant 0 : index
    %64 = vector.load %arg10[%c0_54, %c0_55] : memref<1x32xf32, #tpu.memory_space<vmem>>, vector<1x32xf32>
    %cst_56 = arith.constant dense<0.000000e+00> : vector<32xf32>
    %65 = vector.multi_reduction <add>, %51, %cst_56 [0] : vector<64x32xf32> to vector<32xf32>
    %66 = vector.shape_cast %65 : vector<32xf32> to vector<1x32xf32>
    %67 = arith.addf %64, %66 : vector<1x32xf32>
    %c0_57 = arith.constant 0 : index
    %c0_58 = arith.constant 0 : index
    %68 = vector.load %arg10[%c0_57, %c0_58] : memref<1x32xf32, #tpu.memory_space<vmem>>, vector<1x32xf32>
    tpu.vector_store %arg10[%c0_57, %c0_58], %67 {strides = array<i32>} : memref<1x32xf32, #tpu.memory_space<vmem>>, vector<1x32xf32>,
    %c0_59 = arith.constant 0 : index
    %c0_60 = arith.constant 0 : index
    %69 = vector.load %arg11[%c0_59, %c0_60] : memref<1x32xf32, #tpu.memory_space<vmem>>, vector<1x32xf32>
    %70 = arith.mulf %51, %51 : vector<64x32xf32>
    %cst_61 = arith.constant dense<0.000000e+00> : vector<32xf32>
    %71 = vector.multi_reduction <add>, %70, %cst_61 [0] : vector<64x32xf32> to vector<32xf32>
    %72 = vector.shape_cast %71 : vector<32xf32> to vector<1x32xf32>
    %73 = arith.addf %69, %72 : vector<1x32xf32>
    %c0_62 = arith.constant 0 : index
    %c0_63 = arith.constant 0 : index
    %74 = vector.load %arg11[%c0_62, %c0_63] : memref<1x32xf32, #tpu.memory_space<vmem>>, vector<1x32xf32>
    tpu.vector_store %arg11[%c0_62, %c0_63], %73 {strides = array<i32>} : memref<1x32xf32, #tpu.memory_space<vmem>>, vector<1x32xf32>,
    return
  }
  func.func @transform_0(%arg0: i32, %arg1: i32) -> (i32, i32, i32, i32) {
    %c0_i32 = arith.constant 0 : i32
    %c0_i32_0 = arith.constant 0 : i32
    %c0_i32_1 = arith.constant 0 : i32
    %c0_i32_2 = arith.constant 0 : i32
    return %arg0, %c0_i32, %c0_i32_0, %c0_i32_1 : i32, i32, i32, i32
  }
  func.func @transform_1(%arg0: i32, %arg1: i32) -> (i32, i32) {
    %c1_i32 = arith.constant 1 : i32
    %0 = arith.muli %arg0, %c1_i32 : i32
    %1 = arith.addi %0, %arg1 : i32
    %c0_i32 = arith.constant 0 : i32
    %c0_i32_0 = arith.constant 0 : i32
    return %1, %c0_i32 : i32, i32
  }
  func.func @transform_2(%arg0: i32, %arg1: i32) -> (i32, i32, i32, i32) {
    %c0_i32 = arith.constant 0 : i32
    %c0_i32_0 = arith.constant 0 : i32
    %c0_i32_1 = arith.constant 0 : i32
    %c0_i32_2 = arith.constant 0 : i32
    %c0_i32_3 = arith.constant 0 : i32
    return %c0_i32, %c0_i32_0, %c0_i32_1, %c0_i32_2 : i32, i32, i32, i32
  }
  func.func @transform_3(%arg0: i32, %arg1: i32) -> (i32, i32) {
    %c0_i32 = arith.constant 0 : i32
    %c0_i32_0 = arith.constant 0 : i32
    %c0_i32_1 = arith.constant 0 : i32
    return %c0_i32, %c0_i32_0 : i32, i32
  }
  func.func @transform_4(%arg0: i32, %arg1: i32) -> (i32, i32) {
    %c1_i32 = arith.constant 1 : i32
    %0 = arith.muli %arg0, %c1_i32 : i32
    %1 = arith.addi %0, %arg1 : i32
    %c0_i32 = arith.constant 0 : i32
    %c0_i32_0 = arith.constant 0 : i32
    return %1, %c0_i32 : i32, i32
  }
  func.func @transform_5(%arg0: i32, %arg1: i32) -> (i32, i32) {
    %c1_i32 = arith.constant 1 : i32
    %0 = arith.muli %arg0, %c1_i32 : i32
    %1 = arith.addi %0, %arg1 : i32
    %c0_i32 = arith.constant 0 : i32
    %c0_i32_0 = arith.constant 0 : i32
    return %1, %c0_i32 : i32, i32
  }
  func.func @transform_6(%arg0: i32, %arg1: i32) -> (i32, i32) {
    %c0_i32 = arith.constant 0 : i32
    %c0_i32_0 = arith.constant 0 : i32
    %c0_i32_1 = arith.constant 0 : i32
    return %c0_i32, %c0_i32_0 : i32, i32
  }
  func.func @transform_7(%arg0: i32, %arg1: i32) -> (i32, i32) {
    %c0_i32 = arith.constant 0 : i32
    %c0_i32_0 = arith.constant 0 : i32
    %c0_i32_1 = arith.constant 0 : i32
    return %c0_i32, %c0_i32_0 : i32, i32
  }
  func.func @transform_8(%arg0: i32, %arg1: i32) -> (i32, i32) {
    %c0_i32 = arith.constant 0 : i32
    %c0_i32_0 = arith.constant 0 : i32
    %c0_i32_1 = arith.constant 0 : i32
    return %c0_i32, %c0_i32_0 : i32, i32
  }
  func.func @transform_9(%arg0: i32, %arg1: i32) -> (i32, i32) {
    %c0_i32 = arith.constant 0 : i32
    %c0_i32_0 = arith.constant 0 : i32
    %c0_i32_1 = arith.constant 0 : i32
    return %c0_i32, %c0_i32_0 : i32, i32
  }
}

module attributes {stable_mosaic.version = 11 : i64} {
  func.func @_pass2_kernel(%arg0: i32, %arg1: memref<64x64xf32, #tpu.memory_space<vmem>>, %arg2: memref<64x32xf32, #tpu.memory_space<vmem>>, %arg3: memref<64x64xf32, #tpu.memory_space<vmem>>, %arg4: memref<64x128xf32, #tpu.memory_space<vmem>>, %arg5: memref<1x64xf32, #tpu.memory_space<vmem>>, %arg6: memref<1x64xf32, #tpu.memory_space<vmem>>, %arg7: memref<1x32xf32, #tpu.memory_space<vmem>>, %arg8: memref<1x32xf32, #tpu.memory_space<vmem>>, %arg9: memref<1x64xf32, #tpu.memory_space<vmem>>, %arg10: memref<1x64xf32, #tpu.memory_space<vmem>>, %arg11: memref<1x32xf32, #tpu.memory_space<vmem>>, %arg12: memref<1x32xf32, #tpu.memory_space<vmem>>, %arg13: memref<64x64xf32, #tpu.memory_space<vmem>>, %arg14: memref<64x128xf32, #tpu.memory_space<vmem>>) attributes {dimension_semantics = [#tpu.dimension_semantics<parallel>], iteration_bounds = array<i64: 2>, scalar_prefetch = 0 : i64, scratch_operands = 0 : i64, tpu.core_type = #tpu.core_type<tc>, window_params = [{transform_indices = @transform_0, window_bounds = array<i64: 64, 64>}, {transform_indices = @transform_1, window_bounds = array<i64: 64, 32>}, {transform_indices = @transform_2, window_bounds = array<i64: 64, 64>}, {transform_indices = @transform_3, window_bounds = array<i64: 64, 128>}, {pipeline_mode = #tpu.pipeline_mode<synchronous>, transform_indices = @transform_4, window_bounds = array<i64: 1, 64>}, {pipeline_mode = #tpu.pipeline_mode<synchronous>, transform_indices = @transform_5, window_bounds = array<i64: 1, 64>}, {pipeline_mode = #tpu.pipeline_mode<synchronous>, transform_indices = @transform_6, window_bounds = array<i64: 1, 32>}, {pipeline_mode = #tpu.pipeline_mode<synchronous>, transform_indices = @transform_7, window_bounds = array<i64: 1, 32>}, {pipeline_mode = #tpu.pipeline_mode<synchronous>, transform_indices = @transform_8, window_bounds = array<i64: 1, 64>}, {pipeline_mode = #tpu.pipeline_mode<synchronous>, transform_indices = @transform_9, window_bounds = array<i64: 1, 64>}, {pipeline_mode = #tpu.pipeline_mode<synchronous>, transform_indices = @transform_10, window_bounds = array<i64: 1, 32>}, {pipeline_mode = #tpu.pipeline_mode<synchronous>, transform_indices = @transform_11, window_bounds = array<i64: 1, 32>}, {transform_indices = @transform_12, window_bounds = array<i64: 64, 64>}, {transform_indices = @transform_13, window_bounds = array<i64: 64, 128>}]} {
    %c0 = arith.constant 0 : index
    %c0_0 = arith.constant 0 : index
    %0 = vector.load %arg5[%c0, %c0_0] : memref<1x64xf32, #tpu.memory_space<vmem>>, vector<1x64xf32>
    %cst = arith.constant 7.812500e-03 : f32
    %1 = vector.broadcast %cst : f32 to vector<1x64xf32>
    %2 = arith.mulf %0, %1 : vector<1x64xf32>
    %c0_1 = arith.constant 0 : index
    %c0_2 = arith.constant 0 : index
    %3 = vector.load %arg6[%c0_1, %c0_2] : memref<1x64xf32, #tpu.memory_space<vmem>>, vector<1x64xf32>
    %cst_3 = arith.constant 7.812500e-03 : f32
    %4 = vector.broadcast %cst_3 : f32 to vector<1x64xf32>
    %5 = arith.mulf %3, %4 : vector<1x64xf32>
    %6 = arith.mulf %2, %2 : vector<1x64xf32>
    %7 = arith.subf %5, %6 : vector<1x64xf32>
    %c0_4 = arith.constant 0 : index
    %c0_5 = arith.constant 0 : index
    %8 = vector.load %arg9[%c0_4, %c0_5] : memref<1x64xf32, #tpu.memory_space<vmem>>, vector<1x64xf32>
    %cst_6 = arith.constant 9.99999974E-6 : f32
    %9 = vector.broadcast %cst_6 : f32 to vector<1x64xf32>
    %10 = arith.addf %7, %9 : vector<1x64xf32>
    %11 = math.rsqrt %10 : vector<1x64xf32>
    %12 = arith.mulf %8, %11 : vector<1x64xf32>
    %c0_7 = arith.constant 0 : index
    %c0_8 = arith.constant 0 : index
    %13 = vector.load %arg10[%c0_7, %c0_8] : memref<1x64xf32, #tpu.memory_space<vmem>>, vector<1x64xf32>
    %14 = arith.mulf %2, %12 : vector<1x64xf32>
    %15 = arith.subf %13, %14 : vector<1x64xf32>
    %c0_9 = arith.constant 0 : index
    %c0_10 = arith.constant 0 : index
    %16 = vector.load %arg7[%c0_9, %c0_10] : memref<1x32xf32, #tpu.memory_space<vmem>>, vector<1x32xf32>
    %cst_11 = arith.constant 7.812500e-03 : f32
    %17 = vector.broadcast %cst_11 : f32 to vector<1x32xf32>
    %18 = arith.mulf %16, %17 : vector<1x32xf32>
    %c0_12 = arith.constant 0 : index
    %c0_13 = arith.constant 0 : index
    %19 = vector.load %arg8[%c0_12, %c0_13] : memref<1x32xf32, #tpu.memory_space<vmem>>, vector<1x32xf32>
    %cst_14 = arith.constant 7.812500e-03 : f32
    %20 = vector.broadcast %cst_14 : f32 to vector<1x32xf32>
    %21 = arith.mulf %19, %20 : vector<1x32xf32>
    %22 = arith.mulf %18, %18 : vector<1x32xf32>
    %23 = arith.subf %21, %22 : vector<1x32xf32>
    %c0_15 = arith.constant 0 : index
    %c0_16 = arith.constant 0 : index
    %24 = vector.load %arg11[%c0_15, %c0_16] : memref<1x32xf32, #tpu.memory_space<vmem>>, vector<1x32xf32>
    %cst_17 = arith.constant 9.99999974E-6 : f32
    %25 = vector.broadcast %cst_17 : f32 to vector<1x32xf32>
    %26 = arith.addf %23, %25 : vector<1x32xf32>
    %27 = math.rsqrt %26 : vector<1x32xf32>
    %28 = arith.mulf %24, %27 : vector<1x32xf32>
    %c0_18 = arith.constant 0 : index
    %c0_19 = arith.constant 0 : index
    %29 = vector.load %arg12[%c0_18, %c0_19] : memref<1x32xf32, #tpu.memory_space<vmem>>, vector<1x32xf32>
    %30 = arith.mulf %18, %28 : vector<1x32xf32>
    %31 = arith.subf %29, %30 : vector<1x32xf32>
    %c0_20 = arith.constant 0 : index
    %c0_21 = arith.constant 0 : index
    %32 = vector.load %arg1[%c0_20, %c0_21] : memref<64x64xf32, #tpu.memory_space<vmem>>, vector<64x64xf32>
    %33 = vector.broadcast %12 : vector<1x64xf32> to vector<64x64xf32>
    %34 = arith.mulf %32, %33 : vector<64x64xf32>
    %35 = vector.broadcast %15 : vector<1x64xf32> to vector<64x64xf32>
    %36 = arith.addf %34, %35 : vector<64x64xf32>
    %c0_22 = arith.constant 0 : index
    %c0_23 = arith.constant 0 : index
    %37 = vector.load %arg3[%c0_22, %c0_23] : memref<64x64xf32, #tpu.memory_space<vmem>>, vector<64x64xf32>
    %38 = arith.addf %36, %37 : vector<64x64xf32>
    %cst_24 = arith.constant 0.000000e+00 : f32
    %39 = vector.broadcast %cst_24 : f32 to vector<64x64xf32>
    %40 = arith.maximumf %38, %39 : vector<64x64xf32>
    %c0_25 = arith.constant 0 : index
    %c0_26 = arith.constant 0 : index
    %41 = vector.load %arg13[%c0_25, %c0_26] : memref<64x64xf32, #tpu.memory_space<vmem>>, vector<64x64xf32>
    tpu.vector_store %arg13[%c0_25, %c0_26], %40 {strides = array<i32>} : memref<64x64xf32, #tpu.memory_space<vmem>>, vector<64x64xf32>,
    %c0_27 = arith.constant 0 : index
    %c0_28 = arith.constant 0 : index
    %42 = vector.load %arg2[%c0_27, %c0_28] : memref<64x32xf32, #tpu.memory_space<vmem>>, vector<64x32xf32>
    %43 = vector.broadcast %28 : vector<1x32xf32> to vector<64x32xf32>
    %44 = arith.mulf %42, %43 : vector<64x32xf32>
    %45 = vector.broadcast %31 : vector<1x32xf32> to vector<64x32xf32>
    %46 = arith.addf %44, %45 : vector<64x32xf32>
    %47 = tpu.concatenate %46, %46, %46, %46 in 1 : vector<64x32xf32>, vector<64x32xf32>, vector<64x32xf32>, vector<64x32xf32> -> vector<64x128xf32>
    %c0_29 = arith.constant 0 : index
    %c0_30 = arith.constant 0 : index
    %48 = vector.load %arg4[%c0_29, %c0_30] : memref<64x128xf32, #tpu.memory_space<vmem>>, vector<64x128xf32>
    %49 = arith.addf %47, %48 : vector<64x128xf32>
    %cst_31 = arith.constant 0.000000e+00 : f32
    %50 = vector.broadcast %cst_31 : f32 to vector<64x128xf32>
    %51 = arith.maximumf %49, %50 : vector<64x128xf32>
    %c0_32 = arith.constant 0 : index
    %c0_33 = arith.constant 0 : index
    %52 = vector.load %arg14[%c0_32, %c0_33] : memref<64x128xf32, #tpu.memory_space<vmem>>, vector<64x128xf32>
    tpu.vector_store %arg14[%c0_32, %c0_33], %51 {strides = array<i32>} : memref<64x128xf32, #tpu.memory_space<vmem>>, vector<64x128xf32>,
    return
  }
  func.func @transform_0(%arg0: i32) -> (i32, i32) {
    %c0_i32 = arith.constant 0 : i32
    %c0_i32_0 = arith.constant 0 : i32
    return %arg0, %c0_i32 : i32, i32
  }
  func.func @transform_1(%arg0: i32) -> (i32, i32) {
    %c0_i32 = arith.constant 0 : i32
    %c0_i32_0 = arith.constant 0 : i32
    return %arg0, %c0_i32 : i32, i32
  }
  func.func @transform_2(%arg0: i32) -> (i32, i32) {
    %c0_i32 = arith.constant 0 : i32
    %c0_i32_0 = arith.constant 0 : i32
    return %arg0, %c0_i32 : i32, i32
  }
  func.func @transform_3(%arg0: i32) -> (i32, i32) {
    %c0_i32 = arith.constant 0 : i32
    %c0_i32_0 = arith.constant 0 : i32
    return %arg0, %c0_i32 : i32, i32
  }
  func.func @transform_4(%arg0: i32) -> (i32, i32) {
    %c0_i32 = arith.constant 0 : i32
    %c0_i32_0 = arith.constant 0 : i32
    %c0_i32_1 = arith.constant 0 : i32
    return %c0_i32, %c0_i32_0 : i32, i32
  }
  func.func @transform_5(%arg0: i32) -> (i32, i32) {
    %c0_i32 = arith.constant 0 : i32
    %c0_i32_0 = arith.constant 0 : i32
    %c0_i32_1 = arith.constant 0 : i32
    return %c0_i32, %c0_i32_0 : i32, i32
  }
  func.func @transform_6(%arg0: i32) -> (i32, i32) {
    %c0_i32 = arith.constant 0 : i32
    %c0_i32_0 = arith.constant 0 : i32
    %c0_i32_1 = arith.constant 0 : i32
    return %c0_i32, %c0_i32_0 : i32, i32
  }
  func.func @transform_7(%arg0: i32) -> (i32, i32) {
    %c0_i32 = arith.constant 0 : i32
    %c0_i32_0 = arith.constant 0 : i32
    %c0_i32_1 = arith.constant 0 : i32
    return %c0_i32, %c0_i32_0 : i32, i32
  }
  func.func @transform_8(%arg0: i32) -> (i32, i32) {
    %c0_i32 = arith.constant 0 : i32
    %c0_i32_0 = arith.constant 0 : i32
    %c0_i32_1 = arith.constant 0 : i32
    return %c0_i32, %c0_i32_0 : i32, i32
  }
  func.func @transform_9(%arg0: i32) -> (i32, i32) {
    %c0_i32 = arith.constant 0 : i32
    %c0_i32_0 = arith.constant 0 : i32
    %c0_i32_1 = arith.constant 0 : i32
    return %c0_i32, %c0_i32_0 : i32, i32
  }
  func.func @transform_10(%arg0: i32) -> (i32, i32) {
    %c0_i32 = arith.constant 0 : i32
    %c0_i32_0 = arith.constant 0 : i32
    %c0_i32_1 = arith.constant 0 : i32
    return %c0_i32, %c0_i32_0 : i32, i32
  }
  func.func @transform_11(%arg0: i32) -> (i32, i32) {
    %c0_i32 = arith.constant 0 : i32
    %c0_i32_0 = arith.constant 0 : i32
    %c0_i32_1 = arith.constant 0 : i32
    return %c0_i32, %c0_i32_0 : i32, i32
  }
  func.func @transform_12(%arg0: i32) -> (i32, i32) {
    %c0_i32 = arith.constant 0 : i32
    %c0_i32_0 = arith.constant 0 : i32
    return %arg0, %c0_i32 : i32, i32
  }
  func.func @transform_13(%arg0: i32) -> (i32, i32) {
    %c0_i32 = arith.constant 0 : i32
    %c0_i32_0 = arith.constant 0 : i32
    return %arg0, %c0_i32 : i32, i32
  }
}

</mosaic_0001>

<llo_original>
// kernel: _lambda_.3
$region0: #{_lambda_.3}
  #allocation0 [shape = 'u32[]', space=smem, size = 0x4, offset = 0x4, fixed_abs, tag = 'smem constant byte address 0x4 - core index']
  #allocation1 [shape = 'u32[144,128]{1,0:T(1,128)}', space=vmem, size = 0x12000, scoped, tag = 'internal scratch']
  %s0 = inlined_call_operand.vmem [shape: f32[128,64], index: 0, kind: input, shape index: {}]
  %s1 = inlined_call_operand.vmem [shape: f32[128,32], index: 1, kind: input, shape index: {}]
  %s2 = inlined_call_operand.vmem [shape: f32[128,64], index: 2, kind: input, shape index: {}]
  %s3 = inlined_call_operand.vmem [shape: f32[128,128], index: 3, kind: input, shape index: {}]
  %s4 = inlined_call_operand.vmem [shape: f32[1,64], index: 4, kind: input, shape index: {}]
  %s5 = inlined_call_operand.vmem [shape: f32[1,64], index: 5, kind: input, shape index: {}]
  %s6 = inlined_call_operand.vmem [shape: f32[1,32], index: 6, kind: input, shape index: {}]
  %s7 = inlined_call_operand.vmem [shape: f32[1,32], index: 7, kind: input, shape index: {}]
  %s8 = inlined_call_operand.vmem [shape: f32[1,64], index: 8, kind: input, shape index: {}]
  %s9 = inlined_call_operand.vmem [shape: f32[1,64], index: 9, kind: input, shape index: {}]
  %s10 = inlined_call_operand.vmem [shape: f32[1,32], index: 10, kind: input, shape index: {}]
  %s11 = inlined_call_operand.vmem [shape: f32[1,32], index: 11, kind: input, shape index: {}]
  %s12 = inlined_call_operand.hbm [shape: f32[128,64], index: 12, kind: output, shape index: {0}]
  %s13 = inlined_call_operand.vmem [shape: f32[128,128], index: 13, kind: output, shape index: {1}]
  %14 = xla_tuple %s12, %s13
  %s15 = sld [smem:[#allocation0]]
  $region89: #{_lambda_.3} parent=0
    _
  %s17 = ssub.s32 1, %s15
  %s18 = scalar_select 0, %s17, %s15
  $region1: #{_lambda_.3} parent=0
    #allocation2 [shape = 'u8[65536]{0}', space=vmem, size = 0x10000, scoped, tag = 'output window, operand 0']
    #allocation3 [shape = 's32[2]{0}', space=sflag, size = 0x8, scoped, tag = 'scoped memory for _lambda_.3']
    %19 = vsyncpa [#allocation3], 0
    %s20 = scalar_lea.sflag [#allocation3], 1
    %21 = vsyncpa %s20, 0
    loop: start=0, step=1, limit=4
    $region2: #{_lambda_.3} parent=1 // loop_pre_header
      _
    $region3: #{_lambda_.3} parent=1 // loop_header
      %s23 = sphi 0, %s27
      %p24 = scmp.ge.s32.totalorder %s23, 4
      %s33 = sphi 0, %s35
      %s36 = sphi 0, %s33
      %s37 = sphi 0, %s36
      %s53 = sphi 0, %s37
      %s59 = sphi 0, %s61
      %s62 = sphi 0, %s59
      %s63 = sphi 0, %s62
      %s79 = sphi 0, %s63
      %s85 = sphi 0, %s87
      %s88 = sphi 0, %s85
      %s89 = sphi 0, %s88
      %s105 = sphi 0, %s89
      %s111 = sphi 0, %s113
      %s114 = sphi 0, %s111
      %s115 = sphi 0, %s114
      %s131 = sphi 0, %s115
      %s135 = sphi 0, %s135
      %s137 = sphi 0, %s135
      %s138 = sphi 0, %s137
      %s152 = sphi 0, %s138
      %s156 = sphi 0, %s156
      %s158 = sphi 0, %s156
      %s159 = sphi 0, %s158
      %s173 = sphi 0, %s159
      %s177 = sphi 0, %s177
      %s179 = sphi 0, %s177
      %s180 = sphi 0, %s179
      %s194 = sphi 0, %s180
      %s198 = sphi 0, %s198
      %s200 = sphi 0, %s198
      %s201 = sphi 0, %s200
      %s215 = sphi 0, %s201
      %s219 = sphi 0, %s219
      %s221 = sphi 0, %s219
      %s222 = sphi 0, %s221
      %s236 = sphi 0, %s222
      %s240 = sphi 0, %s240
      %s242 = sphi 0, %s240
      %s243 = sphi 0, %s242
      %s257 = sphi 0, %s243
      %s261 = sphi 0, %s261
      %s263 = sphi 0, %s261
      %s264 = sphi 0, %s263
      %s278 = sphi 0, %s264
      %s282 = sphi 0, %s282
      %s284 = sphi 0, %s282
      %s285 = sphi 0, %s284
      %s299 = sphi 0, %s285
      %s305 = sphi 0, %s307
      %s308 = sphi 0, %s305
      %s309 = sphi 0, %s308
      %s325 = sphi 0, %s309
      %s331 = sphi 0, %s333
      %s334 = sphi 0, %s331
      %s335 = sphi 0, %s334
      %s351 = sphi 0, %s335
    $region4: #{_lambda_.3} parent=1 // loop_header_branch
      %26 = sbr.rel (%p24) target = $region8
    $region5: #{_lambda_.3} parent=1 // loop_body
      %s28 = ssub.s32 %s23, 1
      %s29 = ssub.s32 %s23, 2
      %s30 = sadd.s32 %s23, 1
      %s31 = ssub.s32 %s23, %s30
      %p32 = scmp.eq.s32.totalorder %s31, 0
      %s34 = sadd.s32 %s33, 1
      %s35 = scalar_select %p32, %s33, %s34
      %p38 = pneg %p32
      %p39 = scmp.eq.s32.totalorder %s23, 1
      %p40 = por %p38, %p39
      %p41 = scmp.ne.s32.totalorder %s33, %s36
      %p42 = scmp.eq.s32.totalorder %s23, 0
      %p43 = por %p41, %p42
      %p44 = scmp.ne.s32.totalorder %s33, %s36
      %p45 = scmp.eq.s32.totalorder %s28, 1
      %p46 = por %p44, %p45
      %p47 = scmp.ne.s32.totalorder %s36, %s37
      %p48 = scmp.eq.s32.totalorder %s28, 0
      %p49 = por %p47, %p48
      %p50 = scmp.ne.s32.totalorder %s36, %s37
      %p51 = scmp.eq.s32.totalorder %s29, 1
      %p52 = por %p50, %p51
      %p54 = scmp.ne.s32.totalorder %s37, %s53
      %p55 = scmp.eq.s32.totalorder %s29, 0
      %p56 = por %p54, %p55
      %s57 = ssub.s32 %s23, %s30
      %p58 = scmp.eq.s32.totalorder %s57, 0
      %s60 = sadd.s32 %s59, 1
      %s61 = scalar_select %p58, %s59, %s60
      %p64 = pneg %p58
      %p65 = scmp.eq.s32.totalorder %s23, 1
      %p66 = por %p64, %p65
      %p67 = scmp.ne.s32.totalorder %s59, %s62
      %p68 = scmp.eq.s32.totalorder %s23, 0
      %p69 = por %p67, %p68
      %p70 = scmp.ne.s32.totalorder %s59, %s62
      %p71 = scmp.eq.s32.totalorder %s28, 1
      %p72 = por %p70, %p71
      %p73 = scmp.ne.s32.totalorder %s62, %s63
      %p74 = scmp.eq.s32.totalorder %s28, 0
      %p75 = por %p73, %p74
      %p76 = scmp.ne.s32.totalorder %s62, %s63
      %p77 = scmp.eq.s32.totalorder %s29, 1
      %p78 = por %p76, %p77
      %p80 = scmp.ne.s32.totalorder %s63, %s79
      %p81 = scmp.eq.s32.totalorder %s29, 0
      %p82 = por %p80, %p81
      %s83 = ssub.s32 %s23, %s30
      %p84 = scmp.eq.s32.totalorder %s83, 0
      %s86 = sadd.s32 %s85, 1
      %s87 = scalar_select %p84, %s85, %s86
      %p90 = pneg %p84
      %p91 = scmp.eq.s32.totalorder %s23, 1
      %p92 = por %p90, %p91
      %p93 = scmp.ne.s32.totalorder %s85, %s88
      %p94 = scmp.eq.s32.totalorder %s23, 0
      %p95 = por %p93, %p94
      %p96 = scmp.ne.s32.totalorder %s85, %s88
      %p97 = scmp.eq.s32.totalorder %s28, 1
      %p98 = por %p96, %p97
      %p99 = scmp.ne.s32.totalorder %s88, %s89
      %p100 = scmp.eq.s32.totalorder %s28, 0
      %p101 = por %p99, %p100
      %p102 = scmp.ne.s32.totalorder %s88, %s89
      %p103 = scmp.eq.s32.totalorder %s29, 1
      %p104 = por %p102, %p103
      %p106 = scmp.ne.s32.totalorder %s89, %s105
      %p107 = scmp.eq.s32.totalorder %s29, 0
      %p108 = por %p106, %p107
      %s109 = ssub.s32 %s23, %s30
      %p110 = scmp.eq.s32.totalorder %s109, 0
      %s112 = sadd.s32 %s111, 1
      %s113 = scalar_select %p110, %s111, %s112
      %p116 = pneg %p110
      %p117 = scmp.eq.s32.totalorder %s23, 1
      %p118 = por %p116, %p117
      %p119 = scmp.ne.s32.totalorder %s111, %s114
      %p120 = scmp.eq.s32.totalorder %s23, 0
      %p121 = por %p119, %p120
      %p122 = scmp.ne.s32.totalorder %s111, %s114
      %p123 = scmp.eq.s32.totalorder %s28, 1
      %p124 = por %p122, %p123
      %p125 = scmp.ne.s32.totalorder %s114, %s115
      %p126 = scmp.eq.s32.totalorder %s28, 0
      %p127 = por %p125, %p126
      %p128 = scmp.ne.s32.totalorder %s114, %s115
      %p129 = scmp.eq.s32.totalorder %s29, 1
      %p130 = por %p128, %p129
      %p132 = scmp.ne.s32.totalorder %s115, %s131
      %p133 = scmp.eq.s32.totalorder %s29, 0
      %p134 = por %p132, %p133
      %s136 = sadd.s32 %s135, 1
      %p139 = scmp.eq.s32.totalorder %s23, 1
      %p140 = scmp.ne.s32.totalorder %s135, %s137
      %p141 = scmp.eq.s32.totalorder %s23, 0
      %p142 = por %p140, %p141
      %p143 = scmp.ne.s32.totalorder %s135, %s137
      %p144 = scmp.eq.s32.totalorder %s28, 1
      %p145 = por %p143, %p144
      %p146 = scmp.ne.s32.totalorder %s137, %s138
      %p147 = scmp.eq.s32.totalorder %s28, 0
      %p148 = por %p146, %p147
      %p149 = scmp.ne.s32.totalorder %s137, %s138
      %p150 = scmp.eq.s32.totalorder %s29, 1
      %p151 = por %p149, %p150
      %p153 = scmp.ne.s32.totalorder %s138, %s152
      %p154 = scmp.eq.s32.totalorder %s29, 0
      %p155 = por %p153, %p154
      %s157 = sadd.s32 %s156, 1
      %p160 = scmp.eq.s32.totalorder %s23, 1
      %p161 = scmp.ne.s32.totalorder %s156, %s158
      %p162 = scmp.eq.s32.totalorder %s23, 0
      %p163 = por %p161, %p162
      %p164 = scmp.ne.s32.totalorder %s156, %s158
      %p165 = scmp.eq.s32.totalorder %s28, 1
      %p166 = por %p164, %p165
      %p167 = scmp.ne.s32.totalorder %s158, %s159
      %p168 = scmp.eq.s32.totalorder %s28, 0
      %p169 = por %p167, %p168
      %p170 = scmp.ne.s32.totalorder %s158, %s159
      %p171 = scmp.eq.s32.totalorder %s29, 1
      %p172 = por %p170, %p171
      %p174 = scmp.ne.s32.totalorder %s159, %s173
      %p175 = scmp.eq.s32.totalorder %s29, 0
      %p176 = por %p174, %p175
      %s178 = sadd.s32 %s177, 1
      %p181 = scmp.eq.s32.totalorder %s23, 1
      %p182 = scmp.ne.s32.totalorder %s177, %s179
      %p183 = scmp.eq.s32.totalorder %s23, 0
      %p184 = por %p182, %p183
      %p185 = scmp.ne.s32.totalorder %s177, %s179
      %p186 = scmp.eq.s32.totalorder %s28, 1
      %p187 = por %p185, %p186
      %p188 = scmp.ne.s32.totalorder %s179, %s180
      %p189 = scmp.eq.s32.totalorder %s28, 0
      %p190 = por %p188, %p189
      %p191 = scmp.ne.s32.totalorder %s179, %s180
      %p192 = scmp.eq.s32.totalorder %s29, 1
      %p193 = por %p191, %p192
      %p195 = scmp.ne.s32.totalorder %s180, %s194
      %p196 = scmp.eq.s32.totalorder %s29, 0
      %p197 = por %p195, %p196
      %s199 = sadd.s32 %s198, 1
      %p202 = scmp.eq.s32.totalorder %s23, 1
      %p203 = scmp.ne.s32.totalorder %s198, %s200
      %p204 = scmp.eq.s32.totalorder %s23, 0
      %p205 = por %p203, %p204
      %p206 = scmp.ne.s32.totalorder %s198, %s200
      %p207 = scmp.eq.s32.totalorder %s28, 1
      %p208 = por %p206, %p207
      %p209 = scmp.ne.s32.totalorder %s200, %s201
      %p210 = scmp.eq.s32.totalorder %s28, 0
      %p211 = por %p209, %p210
      %p212 = scmp.ne.s32.totalorder %s200, %s201
      %p213 = scmp.eq.s32.totalorder %s29, 1
      %p214 = por %p212, %p213
      %p216 = scmp.ne.s32.totalorder %s201, %s215
      %p217 = scmp.eq.s32.totalorder %s29, 0
      %p218 = por %p216, %p217
      %s220 = sadd.s32 %s219, 1
      %p223 = scmp.eq.s32.totalorder %s23, 1
      %p224 = scmp.ne.s32.totalorder %s219, %s221
      %p225 = scmp.eq.s32.totalorder %s23, 0
      %p226 = por %p224, %p225
      %p227 = scmp.ne.s32.totalorder %s219, %s221
      %p228 = scmp.eq.s32.totalorder %s28, 1
      %p229 = por %p227, %p228
      %p230 = scmp.ne.s32.totalorder %s221, %s222
      %p231 = scmp.eq.s32.totalorder %s28, 0
      %p232 = por %p230, %p231
      %p233 = scmp.ne.s32.totalorder %s221, %s222
      %p234 = scmp.eq.s32.totalorder %s29, 1
      %p235 = por %p233, %p234
      %p237 = scmp.ne.s32.totalorder %s222, %s236
      %p238 = scmp.eq.s32.totalorder %s29, 0
      %p239 = por %p237, %p238
      %s241 = sadd.s32 %s240, 1
      %p244 = scmp.eq.s32.totalorder %s23, 1
      %p245 = scmp.ne.s32.totalorder %s240, %s242
      %p246 = scmp.eq.s32.totalorder %s23, 0
      %p247 = por %p245, %p246
      %p248 = scmp.ne.s32.totalorder %s240, %s242
      %p249 = scmp.eq.s32.totalorder %s28, 1
      %p250 = por %p248, %p249
      %p251 = scmp.ne.s32.totalorder %s242, %s243
      %p252 = scmp.eq.s32.totalorder %s28, 0
      %p253 = por %p251, %p252
      %p254 = scmp.ne.s32.totalorder %s242, %s243
      %p255 = scmp.eq.s32.totalorder %s29, 1
      %p256 = por %p254, %p255
      %p258 = scmp.ne.s32.totalorder %s243, %s257
      %p259 = scmp.eq.s32.totalorder %s29, 0
      %p260 = por %p258, %p259
      %s262 = sadd.s32 %s261, 1
      %p265 = scmp.eq.s32.totalorder %s23, 1
      %p266 = scmp.ne.s32.totalorder %s261, %s263
      %p267 = scmp.eq.s32.totalorder %s23, 0
      %p268 = por %p266, %p267
      %p269 = scmp.ne.s32.totalorder %s261, %s263
      %p270 = scmp.eq.s32.totalorder %s28, 1
      %p271 = por %p269, %p270
      %p272 = scmp.ne.s32.totalorder %s263, %s264
      %p273 = scmp.eq.s32.totalorder %s28, 0
      %p274 = por %p272, %p273
      %p275 = scmp.ne.s32.totalorder %s263, %s264
      %p276 = scmp.eq.s32.totalorder %s29, 1
      %p277 = por %p275, %p276
      %p279 = scmp.ne.s32.totalorder %s264, %s278
      %p280 = scmp.eq.s32.totalorder %s29, 0
      %p281 = por %p279, %p280
      %s283 = sadd.s32 %s282, 1
      %p286 = scmp.eq.s32.totalorder %s23, 1
      %p287 = scmp.ne.s32.totalorder %s282, %s284
      %p288 = scmp.eq.s32.totalorder %s23, 0
      %p289 = por %p287, %p288
      %p290 = scmp.ne.s32.totalorder %s282, %s284
      %p291 = scmp.eq.s32.totalorder %s28, 1
      %p292 = por %p290, %p291
      %p293 = scmp.ne.s32.totalorder %s284, %s285
      %p294 = scmp.eq.s32.totalorder %s28, 0
      %p295 = por %p293, %p294
      %p296 = scmp.ne.s32.totalorder %s284, %s285
      %p297 = scmp.eq.s32.totalorder %s29, 1
      %p298 = por %p296, %p297
      %p300 = scmp.ne.s32.totalorder %s285, %s299
      %p301 = scmp.eq.s32.totalorder %s29, 0
      %p302 = por %p300, %p301
      %s303 = ssub.s32 %s23, %s30
      %p304 = scmp.eq.s32.totalorder %s303, 0
      %s306 = sadd.s32 %s305, 1
      %s307 = scalar_select %p304, %s305, %s306
      %p310 = pneg %p304
      %p311 = scmp.eq.s32.totalorder %s23, 1
      %p312 = por %p310, %p311
      %p313 = scmp.ne.s32.totalorder %s305, %s308
      %p314 = scmp.eq.s32.totalorder %s23, 0
      %p315 = por %p313, %p314
      %p316 = scmp.ne.s32.totalorder %s305, %s308
      %p317 = scmp.eq.s32.totalorder %s28, 1
      %p318 = por %p316, %p317
      %p319 = scmp.ne.s32.totalorder %s308, %s309
      %p320 = scmp.eq.s32.totalorder %s28, 0
      %p321 = por %p319, %p320
      %p322 = scmp.ne.s32.totalorder %s308, %s309
      %p323 = scmp.eq.s32.totalorder %s29, 1
      %p324 = por %p322, %p323
      %p326 = scmp.ne.s32.totalorder %s309, %s325
      %p327 = scmp.eq.s32.totalorder %s29, 0
      %p328 = por %p326, %p327
      %s329 = ssub.s32 %s23, %s30
      %p330 = scmp.eq.s32.totalorder %s329, 0
      %s332 = sadd.s32 %s331, 1
      %s333 = scalar_select %p330, %s331, %s332
      %p336 = pneg %p330
      %p337 = scmp.eq.s32.totalorder %s23, 1
      %p338 = por %p336, %p337
      %p339 = scmp.ne.s32.totalorder %s331, %s334
      %p340 = scmp.eq.s32.totalorder %s23, 0
      %p341 = por %p339, %p340
      %p342 = scmp.ne.s32.totalorder %s331, %s334
      %p343 = scmp.eq.s32.totalorder %s28, 1
      %p344 = por %p342, %p343
      %p345 = scmp.ne.s32.totalorder %s334, %s335
      %p346 = scmp.eq.s32.totalorder %s28, 0
      %p347 = por %p345, %p346
      %p348 = scmp.ne.s32.totalorder %s334, %s335
      %p349 = scmp.eq.s32.totalorder %s29, 1
      %p350 = por %p348, %p349
      %p352 = scmp.ne.s32.totalorder %s335, %s351
      %p353 = scmp.eq.s32.totalorder %s29, 0
      %p354 = por %p352, %p353
      %p355 = scmp.le.s32.totalorder 1, %s23
      %p356 = scmp.lt.s32.totalorder %s23, 3
      %p357 = pnand %p355, %p356
      %p358 = pneg %p357
      // Predicated region
      $region9: #{_lambda_.3} parent=5 // pred_check
        _
      $region10: #{_lambda_.3} parent=5 // pred_check_branch
        %360 = sbr.rel (%p357) target = $region12
      $region11: #{_lambda_.3} parent=5 // pred_region
        %s361 = ssub.s32 %s23, 1
        // Predicated region
        $region13: #{_lambda_.3} parent=11 // pred_check
          %p362 = pneg %p148
        $region14: #{_lambda_.3} parent=11 // pred_check_branch
          %364 = sbr.rel (%p362) target = $region16
        $region15: #{_lambda_.3} parent=11 // pred_region
          _
        $region16: #{_lambda_.3} parent=11 // pred_fallthru
          _
        // Predicated region
        $region17: #{_lambda_.3} parent=11 // pred_check
          %p365 = pneg %p169
        $region18: #{_lambda_.3} parent=11 // pred_check_branch
          %367 = sbr.rel (%p365) target = $region20
        $region19: #{_lambda_.3} parent=11 // pred_region
          _
        $region20: #{_lambda_.3} parent=11 // pred_fallthru
          _
        // Predicated region
        $region21: #{_lambda_.3} parent=11 // pred_check
          %p368 = pneg %p190
        $region22: #{_lambda_.3} parent=11 // pred_check_branch
          %370 = sbr.rel (%p368) target = $region24
        $region23: #{_lambda_.3} parent=11 // pred_region
          _
        $region24: #{_lambda_.3} parent=11 // pred_fallthru
          _
        // Predicated region
        $region25: #{_lambda_.3} parent=11 // pred_check
          %p371 = pneg %p211
        $region26: #{_lambda_.3} parent=11 // pred_check_branch
          %373 = sbr.rel (%p371) target = $region28
        $region27: #{_lambda_.3} parent=11 // pred_region
          _
        $region28: #{_lambda_.3} parent=11 // pred_fallthru
          _
        // Predicated region
        $region29: #{_lambda_.3} parent=11 // pred_check
          %p374 = pneg %p232
        $region30: #{_lambda_.3} parent=11 // pred_check_branch
          %376 = sbr.rel (%p374) target = $region32
        $region31: #{_lambda_.3} parent=11 // pred_region
          _
        $region32: #{_lambda_.3} parent=11 // pred_fallthru
          _
        // Predicated region
        $region33: #{_lambda_.3} parent=11 // pred_check
          %p377 = pneg %p253
        $region34: #{_lambda_.3} parent=11 // pred_check_branch
          %379 = sbr.rel (%p377) target = $region36
        $region35: #{_lambda_.3} parent=11 // pred_region
          _
        $region36: #{_lambda_.3} parent=11 // pred_fallthru
          _
        // Predicated region
        $region37: #{_lambda_.3} parent=11 // pred_check
          %p380 = pneg %p274
        $region38: #{_lambda_.3} parent=11 // pred_check_branch
          %382 = sbr.rel (%p380) target = $region40
        $region39: #{_lambda_.3} parent=11 // pred_region
          _
        $region40: #{_lambda_.3} parent=11 // pred_fallthru
          _
        // Predicated region
        $region41: #{_lambda_.3} parent=11 // pred_check
          %p383 = pneg %p295
        $region42: #{_lambda_.3} parent=11 // pred_check_branch
          %385 = sbr.rel (%p383) target = $region44
        $region43: #{_lambda_.3} parent=11 // pred_region
          _
        $region44: #{_lambda_.3} parent=11 // pred_fallthru
          _
      $region12: #{_lambda_.3} parent=5 // pred_fallthru
        _
      %p386 = scmp.lt.s32.totalorder %s23, 2
      // Predicated region
      $region45: #{_lambda_.3} parent=5 // pred_check
        %p387 = pneg %p386
      $region46: #{_lambda_.3} parent=5 // pred_check_branch
        %389 = sbr.rel (%p387) target = $region48
      $region47: #{_lambda_.3} parent=5 // pred_region
        // Predicated region
        $region49: #{_lambda_.3} parent=47 // pred_check
          %p390 = pneg %p43
        $region50: #{_lambda_.3} parent=47 // pred_check_branch
          %392 = sbr.rel (%p390) target = $region52
        $region51: #{_lambda_.3} parent=47 // pred_region
          %s393 = smul.u32 8, %s23
          %p394 = scmp.lt.s32.totalorder %s393, 15
          %s395 = scalar_select %p394, %s393, 15
          %s396 = smul.addr %s395, 8
          %s397 = scalar_lea.vmem %s0, %s396
          %s398 = smul.u32 8, %s23
        $region52: #{_lambda_.3} parent=47 // pred_fallthru
          _
        // Predicated region
        $region53: #{_lambda_.3} parent=47 // pred_check
          %p399 = pneg %p69
        $region54: #{_lambda_.3} parent=47 // pred_check_branch
          %401 = sbr.rel (%p399) target = $region56
        $region55: #{_lambda_.3} parent=47 // pred_region
          %s402 = smul.u32 8, %s23
          %p403 = scmp.lt.s32.totalorder %s402, 15
          %s404 = scalar_select %p403, %s402, 15
          %s405 = smul.addr %s404, 8
          %s406 = scalar_lea.vmem %s1, %s405
          %s407 = smul.u32 8, %s23
        $region56: #{_lambda_.3} parent=47 // pred_fallthru
          _
        // Predicated region
        $region57: #{_lambda_.3} parent=47 // pred_check
          %p408 = pneg %p95
        $region58: #{_lambda_.3} parent=47 // pred_check_branch
          %410 = sbr.rel (%p408) target = $region60
        $region59: #{_lambda_.3} parent=47 // pred_region
          %s411 = smul.u32 8, %s23
          %p412 = scmp.lt.s32.totalorder %s411, 15
          %s413 = scalar_select %p412, %s411, 15
          %s414 = smul.addr %s413, 8
          %s415 = scalar_lea.vmem %s2, %s414
          %s416 = smul.u32 8, %s23
        $region60: #{_lambda_.3} parent=47 // pred_fallthru
          _
        // Predicated region
        $region61: #{_lambda_.3} parent=47 // pred_check
          %p417 = pneg %p121
        $region62: #{_lambda_.3} parent=47 // pred_check_branch
          %419 = sbr.rel (%p417) target = $region64
        $region63: #{_lambda_.3} parent=47 // pred_region
          %s420 = smul.u32 8, %s23
          %p421 = scmp.lt.s32.totalorder %s420, 15
          %s422 = scalar_select %p421, %s420, 15
          %s423 = smul.addr %s422, 8
          %s424 = scalar_lea.vmem %s3, %s423
          %s425 = smul.u32 8, %s23
        $region64: #{_lambda_.3} parent=47 // pred_fallthru
          _
      $region48: #{_lambda_.3} parent=5 // pred_fallthru
        _
      %p426 = scmp.le.s32.totalorder 1, %s23
      %p427 = scmp.lt.s32.totalorder %s23, 3
      %p428 = pnand %p426, %p427
      %p429 = pneg %p428
      // Predicated region
      $region65: #{_lambda_.3} parent=5 // pred_check
        _
      $region66: #{_lambda_.3} parent=5 // pred_check_branch
        %431 = sbr.rel (%p428) target = $region68
      $region67: #{_lambda_.3} parent=5 // pred_region
        %s432 = ssub.s32 %s23, 1
        %s433 = smul.u32 8, %s28
        %p434 = scmp.lt.s32.totalorder %s433, 15
        %s435 = scalar_select %p434, %s433, 15
        %s436 = smul.addr %s435, 8
        %s437 = scalar_lea.vmem %s0, %s436
        %p438 = pneg %p49
        %p439 = pneg %p46
        %s440 = smul.u32 8, %s28
        %p441 = scmp.lt.s32.totalorder %s440, 15
        %s442 = scalar_select %p441, %s440, 15
        %s443 = smul.addr %s442, 8
        %s444 = scalar_lea.vmem %s1, %s443
        %p445 = pneg %p75
        %p446 = pneg %p72
        %s447 = smul.u32 8, %s28
        %p448 = scmp.lt.s32.totalorder %s447, 15
        %s449 = scalar_select %p448, %s447, 15
        %s450 = smul.addr %s449, 8
        %s451 = scalar_lea.vmem %s2, %s450
        %p452 = pneg %p101
        %p453 = pneg %p98
        %s454 = smul.u32 8, %s28
        %p455 = scmp.lt.s32.totalorder %s454, 15
        %s456 = scalar_select %p455, %s454, 15
        %s457 = smul.addr %s456, 8
        %s458 = scalar_lea.vmem %s3, %s457
        %p459 = pneg %p127
        %p460 = pneg %p124
        %p461 = pneg %p148
        %p462 = pneg %p145
        %p463 = pneg %p169
        %p464 = pneg %p166
        %p465 = pneg %p190
        %p466 = pneg %p187
        %p467 = pneg %p211
        %p468 = pneg %p208
        %p469 = pneg %p232
        %p470 = pneg %p229
        %p471 = pneg %p253
        %p472 = pneg %p250
        %p473 = pneg %p274
        %p474 = pneg %p271
        %p475 = pneg %p295
        %p476 = pneg %p292
        %p477 = pneg %p321
        %p478 = pneg %p318
        %s479 = sand.u32 %s308, 1
        %s480 = scalar_lea.sflag [#allocation3], %s479
        %s481 = sand.u32 %s308, 1
        %s482 = smul.addr %s481, 64
        %s483 = scalar_lea.vmem [#allocation2], %s482
        %p484 = pneg %p347
        %p485 = pneg %p344
        %s486 = smul.u32 8, %s28
        %p487 = scmp.lt.s32.totalorder %s486, 15
        %s488 = scalar_select %p487, %s486, 15
        %s489 = smul.addr %s488, 8
        %s490 = scalar_lea.vmem %s13, %s489
        %s491 = smul.u32 8, %s28
        %p492 = scmp.lt.s32.totalorder %s491, 15
        %s493 = scalar_select %p492, %s491, 15
        %s494 = smul.addr %s493, 8
        %s495 = scalar_lea.vmem %s0, %s494
        %s496 = smul.u32 8, %s28
        %s497 = smul.u32 8, %s28
        %p498 = scmp.lt.s32.totalorder %s497, 15
        %s499 = scalar_select %p498, %s497, 15
        %s500 = smul.addr %s499, 8
        %s501 = scalar_lea.vmem %s1, %s500
        %s502 = smul.u32 8, %s28
        %s503 = smul.u32 8, %s28
        %p504 = scmp.lt.s32.totalorder %s503, 15
        %s505 = scalar_select %p504, %s503, 15
        %s506 = smul.addr %s505, 8
        %s507 = scalar_lea.vmem %s2, %s506
        %s508 = smul.u32 8, %s28
        %s509 = smul.u32 8, %s28
        %p510 = scmp.lt.s32.totalorder %s509, 15
        %s511 = scalar_select %p510, %s509, 15
        %s512 = smul.addr %s511, 8
        %s513 = scalar_lea.vmem %s3, %s512
        %s514 = smul.u32 8, %s28
        %s515 = smul.u32 8, %s28
        %s516 = smul.u32 8, %s28
        %p517 = scmp.lt.s32.totalorder %s516, 15
        %s518 = scalar_select %p517, %s516, 15
        %s519 = smul.addr %s518, 8
        %s520 = scalar_lea.vmem %s13, %s519
        %s521 = smul.u32 8, %s28
        %v522 = vld [vmem:[%s4] sm:$0x1]
        %v523 = vmul.f32 %v522, 0.0078125
        %v524 = vld [vmem:[%s5] sm:$0x1]
        %v525 = vmul.f32 %v524, 0.0078125
        %v526 = vmul.f32 %v523, %v523
        %v527 = vsub.f32 %v525, %v526
        %v528 = vld [vmem:[%s8] sm:$0x1]
        %v529 = vadd.f32 %v527, 1e-05
        %v530 = vrsqrt.pop %v529
        %v531 = vmul.f32 %v528, %v530
        %v532 = vld [vmem:[%s9] sm:$0x1]
        %v533 = vmul.f32 %v523, %v531
        %v534 = vsub.f32 %v532, %v533
        %v535 = vld [vmem:[%s6] sm:$0x1]
        %v536 = vmul.f32 %v535, 0.0078125
        %v537 = vld [vmem:[%s7] sm:$0x1]
        %v538 = vmul.f32 %v537, 0.0078125
        %v539 = vmul.f32 %v536, %v536
        %v540 = vsub.f32 %v538, %v539
        %v541 = vld [vmem:[%s10] sm:$0x1]
        %v542 = vadd.f32 %v540, 1e-05
        %v543 = vrsqrt.pop %v542
        %v544 = vmul.f32 %v541, %v543
        %v545 = vld [vmem:[%s11] sm:$0x1]
        %v546 = vmul.f32 %v536, %v544
        %v547 = vsub.f32 %v545, %v546
        %v548 = vld [vmem:[%s495] sm:$0xff]
        %v549 = vld [vmem:[%s495 + $0x8] sm:$0xff]
        %v550 = vld [vmem:[%s495 + $0x10] sm:$0xff]
        %v551 = vld [vmem:[%s495 + $0x18] sm:$0xff]
        %v552 = vld [vmem:[%s495 + $0x20] sm:$0xff]
        %v553 = vld [vmem:[%s495 + $0x28] sm:$0xff]
        %v554 = vld [vmem:[%s495 + $0x30] sm:$0xff]
        %v555 = vld [vmem:[%s495 + $0x38] sm:$0xff]
        %v557 = vlaneseq
        %v558 = vshrl.u32 %v557, 7
        %v559 = vsub.s32 0, %v558
        %v560 = vrot.slane %v531, %v559
        %v562 = vmul.f32 %v548, %v560
        %v563 = vmul.f32 %v549, %v560
        %v564 = vmul.f32 %v550, %v560
        %v565 = vmul.f32 %v551, %v560
        %v566 = vmul.f32 %v552, %v560
        %v567 = vmul.f32 %v553, %v560
        %v568 = vmul.f32 %v554, %v560
        %v569 = vmul.f32 %v555, %v560
        %v571 = vlaneseq
        %v572 = vshrl.u32 %v571, 7
        %v573 = vsub.s32 0, %v572
        %v574 = vrot.slane %v534, %v573
        %v576 = vadd.f32 %v562, %v574
        %v577 = vadd.f32 %v563, %v574
        %v578 = vadd.f32 %v564, %v574
        %v579 = vadd.f32 %v565, %v574
        %v580 = vadd.f32 %v566, %v574
        %v581 = vadd.f32 %v567, %v574
        %v582 = vadd.f32 %v568, %v574
        %v583 = vadd.f32 %v569, %v574
        %v584 = vld [vmem:[%s507] sm:$0xff]
        %v585 = vld [vmem:[%s507 + $0x8] sm:$0xff]
        %v586 = vld [vmem:[%s507 + $0x10] sm:$0xff]
        %v587 = vld [vmem:[%s507 + $0x18] sm:$0xff]
        %v588 = vld [vmem:[%s507 + $0x20] sm:$0xff]
        %v589 = vld [vmem:[%s507 + $0x28] sm:$0xff]
        %v590 = vld [vmem:[%s507 + $0x30] sm:$0xff]
        %v591 = vld [vmem:[%s507 + $0x38] sm:$0xff]
        %v592 = vadd.f32 %v576, %v584
        %v593 = vadd.f32 %v577, %v585
        %v594 = vadd.f32 %v578, %v586
        %v595 = vadd.f32 %v579, %v587
        %v596 = vadd.f32 %v580, %v588
        %v597 = vadd.f32 %v581, %v589
        %v598 = vadd.f32 %v582, %v590
        %v599 = vadd.f32 %v583, %v591
        %v600 = vmax.f32 %v592, 0.0
        %v601 = vmax.f32 %v593, 0.0
        %v602 = vmax.f32 %v594, 0.0
        %v603 = vmax.f32 %v595, 0.0
        %v604 = vmax.f32 %v596, 0.0
        %v605 = vmax.f32 %v597, 0.0
        %v606 = vmax.f32 %v598, 0.0
        %v607 = vmax.f32 %v599, 0.0
        %vm608 = vcmask 523264
        %609 = vst.msk [vmem:[%s483] sm:$0xff] %vm608, %v600
        %610 = vst.msk [vmem:[%s483 + $0x8] sm:$0xff] %vm608, %v601
        %611 = vst.msk [vmem:[%s483 + $0x10] sm:$0xff] %vm608, %v602
        %612 = vst.msk [vmem:[%s483 + $0x18] sm:$0xff] %vm608, %v603
        %613 = vst.msk [vmem:[%s483 + $0x20] sm:$0xff] %vm608, %v604
        %614 = vst.msk [vmem:[%s483 + $0x28] sm:$0xff] %vm608, %v605
        %615 = vst.msk [vmem:[%s483 + $0x30] sm:$0xff] %vm608, %v606
        %616 = vst.msk [vmem:[%s483 + $0x38] sm:$0xff] %vm608, %v607
        %v617 = vld [vmem:[%s501] sm:$0xff]
        %v618 = vld [vmem:[%s501 + $0x8] sm:$0xff]
        %v619 = vld [vmem:[%s501 + $0x10] sm:$0xff]
        %v620 = vld [vmem:[%s501 + $0x18] sm:$0xff]
        %v621 = vld [vmem:[%s501 + $0x20] sm:$0xff]
        %v622 = vld [vmem:[%s501 + $0x28] sm:$0xff]
        %v623 = vld [vmem:[%s501 + $0x30] sm:$0xff]
        %v624 = vld [vmem:[%s501 + $0x38] sm:$0xff]
        %v626 = vlaneseq
        %v627 = vshrl.u32 %v626, 7
        %v628 = vsub.s32 0, %v627
        %v629 = vrot.slane %v544, %v628
        %v631 = vmul.f32 %v617, %v629
        %v632 = vmul.f32 %v618, %v629
        %v633 = vmul.f32 %v619, %v629
        %v634 = vmul.f32 %v620, %v629
        %v635 = vmul.f32 %v621, %v629
        %v636 = vmul.f32 %v622, %v629
        %v637 = vmul.f32 %v623, %v629
        %v638 = vmul.f32 %v624, %v629
        %v640 = vlaneseq
        %v641 = vshrl.u32 %v640, 7
        %v642 = vsub.s32 0, %v641
        %v643 = vrot.slane %v547, %v642
        %v645 = vadd.f32 %v631, %v643
        %v646 = vadd.f32 %v632, %v643
        %v647 = vadd.f32 %v633, %v643
        %v648 = vadd.f32 %v634, %v643
        %v649 = vadd.f32 %v635, %v643
        %v650 = vadd.f32 %v636, %v643
        %v651 = vadd.f32 %v637, %v643
        %v652 = vadd.f32 %v638, %v643
        %661 = vrot.lane.b32.xlu0 %v645, 32
        %v662 = vpop.permute.xlu0 %661
        %663 = vrot.lane.b32.xlu0 %v646, 32
        %v664 = vpop.permute.xlu0 %663
        %665 = vrot.lane.b32.xlu0 %v647, 32
        %v666 = vpop.permute.xlu0 %665
        %667 = vrot.lane.b32.xlu0 %v648, 32
        %v668 = vpop.permute.xlu0 %667
        %669 = vrot.lane.b32.xlu0 %v649, 32
        %v670 = vpop.permute.xlu0 %669
        %671 = vrot.lane.b32.xlu0 %v650, 32
        %v672 = vpop.permute.xlu0 %671
        %673 = vrot.lane.b32.xlu0 %v651, 32
        %v674 = vpop.permute.xlu0 %673
        %675 = vrot.lane.b32.xlu0 %v652, 32
        %v676 = vpop.permute.xlu0 %675
        %685 = vrot.lane.b32.xlu0 %v645, 64
        %v686 = vpop.permute.xlu0 %685
        %687 = vrot.lane.b32.xlu0 %v646, 64
        %v688 = vpop.permute.xlu0 %687
        %689 = vrot.lane.b32.xlu0 %v647, 64
        %v690 = vpop.permute.xlu0 %689
        %691 = vrot.lane.b32.xlu0 %v648, 64
        %v692 = vpop.permute.xlu0 %691
        %693 = vrot.lane.b32.xlu0 %v649, 64
        %v694 = vpop.permute.xlu0 %693
        %695 = vrot.lane.b32.xlu0 %v650, 64
        %v696 = vpop.permute.xlu0 %695
        %697 = vrot.lane.b32.xlu0 %v651, 64
        %v698 = vpop.permute.xlu0 %697
        %699 = vrot.lane.b32.xlu0 %v652, 64
        %v700 = vpop.permute.xlu0 %699
        %709 = vrot.lane.b32.xlu0 %v645, 96
        %v710 = vpop.permute.xlu0 %709
        %711 = vrot.lane.b32.xlu0 %v646, 96
        %v712 = vpop.permute.xlu0 %711
        %713 = vrot.lane.b32.xlu0 %v647, 96
        %v714 = vpop.permute.xlu0 %713
        %715 = vrot.lane.b32.xlu0 %v648, 96
        %v716 = vpop.permute.xlu0 %715
        %717 = vrot.lane.b32.xlu0 %v649, 96
        %v718 = vpop.permute.xlu0 %717
        %719 = vrot.lane.b32.xlu0 %v650, 96
        %v720 = vpop.permute.xlu0 %719
        %721 = vrot.lane.b32.xlu0 %v651, 96
        %v722 = vpop.permute.xlu0 %721
        %723 = vrot.lane.b32.xlu0 %v652, 96
        %v724 = vpop.permute.xlu0 %723
        %vm733 = vcmask 261120
        %v734 = vsel %vm733, %v645, %v662
        %v735 = vsel %vm733, %v646, %v664
        %v736 = vsel %vm733, %v647, %v666
        %v737 = vsel %vm733, %v648, %v668
        %v738 = vsel %vm733, %v649, %v670
        %v739 = vsel %vm733, %v650, %v672
        %v740 = vsel %vm733, %v651, %v674
        %v741 = vsel %vm733, %v652, %v676
        %v742 = vsel %vm608, %v734, %v686
        %v743 = vsel %vm608, %v735, %v688
        %v744 = vsel %vm608, %v736, %v690
        %v745 = vsel %vm608, %v737, %v692
        %v746 = vsel %vm608, %v738, %v694
        %v747 = vsel %vm608, %v739, %v696
        %v748 = vsel %vm608, %v740, %v698
        %v749 = vsel %vm608, %v741, %v700
        %vm750 = vcmask 785408
        %v751 = vsel %vm750, %v742, %v710
        %v752 = vsel %vm750, %v743, %v712
        %v753 = vsel %vm750, %v744, %v714
        %v754 = vsel %vm750, %v745, %v716
        %v755 = vsel %vm750, %v746, %v718
        %v756 = vsel %vm750, %v747, %v720
        %v757 = vsel %vm750, %v748, %v722
        %v758 = vsel %vm750, %v749, %v724
        %v759 = vld [vmem:[%s513] sm:$0xff]
        %v760 = vld [vmem:[%s513 + $0x8] sm:$0xff]
        %v761 = vld [vmem:[%s513 + $0x10] sm:$0xff]
        %v762 = vld [vmem:[%s513 + $0x18] sm:$0xff]
        %v763 = vld [vmem:[%s513 + $0x20] sm:$0xff]
        %v764 = vld [vmem:[%s513 + $0x28] sm:$0xff]
        %v765 = vld [vmem:[%s513 + $0x30] sm:$0xff]
        %v766 = vld [vmem:[%s513 + $0x38] sm:$0xff]
        %v767 = vadd.f32 %v751, %v759
        %v768 = vadd.f32 %v752, %v760
        %v769 = vadd.f32 %v753, %v761
        %v770 = vadd.f32 %v754, %v762
        %v771 = vadd.f32 %v755, %v763
        %v772 = vadd.f32 %v756, %v764
        %v773 = vadd.f32 %v757, %v765
        %v774 = vadd.f32 %v758, %v766
        %v775 = vmax.f32 %v767, 0.0
        %v776 = vmax.f32 %v768, 0.0
        %v777 = vmax.f32 %v769, 0.0
        %v778 = vmax.f32 %v770, 0.0
        %v779 = vmax.f32 %v771, 0.0
        %v780 = vmax.f32 %v772, 0.0
        %v781 = vmax.f32 %v773, 0.0
        %v782 = vmax.f32 %v774, 0.0
        %783 = vst [vmem:[%s520] sm:$0xff] %v775
        %784 = vst [vmem:[%s520 + $0x8] sm:$0xff] %v776
        %785 = vst [vmem:[%s520 + $0x10] sm:$0xff] %v777
        %786 = vst [vmem:[%s520 + $0x18] sm:$0xff] %v778
        %787 = vst [vmem:[%s520 + $0x20] sm:$0xff] %v779
        %788 = vst [vmem:[%s520 + $0x28] sm:$0xff] %v780
        %789 = vst [vmem:[%s520 + $0x30] sm:$0xff] %v781
        %790 = vst [vmem:[%s520 + $0x38] sm:$0xff] %v782
        %s791 = sand.u32 %s308, 1
        %s792 = scalar_lea.sflag [#allocation3], %s791
        %s793 = sand.u32 %s308, 1
        %s794 = smul.addr %s793, 64
        %s795 = scalar_lea.vmem [#allocation2], %s794
        %s796 = smul.u32 8, %s28
        %p797 = scmp.lt.s32.totalorder %s796, 15
        %s798 = scalar_select %p797, %s796, 15
        %s799 = smul.addr %s798, 8
        %s800 = scalar_lea.vmem %s13, %s799
        // Predicated region
        $region69: #{_lambda_.3} parent=67 // pred_check
          %p801 = pneg %p318
        $region70: #{_lambda_.3} parent=67 // pred_check_branch
          %803 = sbr.rel (%p801) target = $region72
        $region71: #{_lambda_.3} parent=67 // pred_region
          %s804 = smul.u32 8, %s28
          %s806 = ssub.s32 1024, 1024
          %807 = vsyncadd %s792, %s806
          %s808 = smul.addr %s804, 128
          %s809 = scalar_lea.hbm %s12, %s808
          %s810 = sshll.u32 %s795, 4
          %s811 = int_to_ptr.vmem [resolvable:$true] %s810
          %816 = dma.vmem_to_hbm [thread:$0]  %s811, 1024, %s809, %s792, 128, 128, 8
        $region72: #{_lambda_.3} parent=67 // pred_fallthru
          _
        // Predicated region
        $region73: #{_lambda_.3} parent=67 // pred_check
          %p817 = pneg %p344
        $region74: #{_lambda_.3} parent=67 // pred_check_branch
          %819 = sbr.rel (%p817) target = $region76
        $region75: #{_lambda_.3} parent=67 // pred_region
          %s820 = smul.u32 8, %s28
        $region76: #{_lambda_.3} parent=67 // pred_fallthru
          _
      $region68: #{_lambda_.3} parent=5 // pred_fallthru
        _
      %p821 = scmp.le.s32.totalorder 2, %s23
      // Predicated region
      $region77: #{_lambda_.3} parent=5 // pred_check
        %p822 = pneg %p821
      $region78: #{_lambda_.3} parent=5 // pred_check_branch
        %824 = sbr.rel (%p822) target = $region80
      $region79: #{_lambda_.3} parent=5 // pred_region
        %s825 = ssub.s32 %s23, 2
        // Predicated region
        $region81: #{_lambda_.3} parent=79 // pred_check
          %p826 = pneg %p324
        $region82: #{_lambda_.3} parent=79 // pred_check_branch
          %828 = sbr.rel (%p826) target = $region84
        $region83: #{_lambda_.3} parent=79 // pred_region
          %s829 = sand.u32 %s309, 1
          %s830 = scalar_lea.sflag [#allocation3], %s829
          %s831 = sand.u32 %s309, 1
          %s832 = smul.addr %s831, 64
          %s833 = scalar_lea.vmem [#allocation2], %s832
          %834 = dma.done %s830, 1024
        $region84: #{_lambda_.3} parent=79 // pred_fallthru
          _
        // Predicated region
        $region85: #{_lambda_.3} parent=79 // pred_check
          %p835 = pneg %p350
        $region86: #{_lambda_.3} parent=79 // pred_check_branch
          %837 = sbr.rel (%p835) target = $region88
        $region87: #{_lambda_.3} parent=79 // pred_region
          %s838 = smul.u32 8, %s29
          %p839 = scmp.lt.s32.totalorder %s838, 15
          %s840 = scalar_select %p839, %s838, 15
          %s841 = smul.addr %s840, 8
          %s842 = scalar_lea.vmem %s13, %s841
        $region88: #{_lambda_.3} parent=79 // pred_fallthru
          _
      $region80: #{_lambda_.3} parent=5 // pred_fallthru
        _
    $region6: #{_lambda_.3} parent=1 // loop_footer
      %s27 = sadd.s32 1, %s23
    $region7: #{_lambda_.3} parent=1 // loop_footer_branch
      %22 = sbr.rel target = $region3
    $region8: #{_lambda_.3} parent=1 // loop_exit
      _
    %843 = vsyncpa [#allocation3], 1
    %s844 = scalar_lea.sflag [#allocation3], 1
    %845 = vsyncpa %s844, 1

// kernel: _lambda_.2
$region0: #{_lambda_.2}
  #allocation0 [shape = 'u32[]', space=smem, size = 0x4, offset = 0x4, fixed_abs, tag = 'smem constant byte address 0x4 - core index']
  #allocation1 [shape = 'u32[144,128]{1,0:T(1,128)}', space=vmem, size = 0x12000, scoped, tag = 'internal scratch']
  %s0 = inlined_call_operand.vmem [shape: f32[2,9,9,128], index: 0, kind: input, shape index: {}]
  %s1 = inlined_call_operand.vmem [shape: f32[128,64], index: 1, kind: input, shape index: {}]
  %s2 = inlined_call_operand.vmem [shape: bf16[2,2,128,64], index: 2, kind: input, shape index: {}]
  %s3 = inlined_call_operand.vmem [shape: bf16[64,32], index: 3, kind: input, shape index: {}]
  %s4 = inlined_call_operand.vmem [shape: f32[128,64], index: 4, kind: output, shape index: {0}]
  %s5 = inlined_call_operand.vmem [shape: f32[128,32], index: 5, kind: output, shape index: {1}]
  %s6 = inlined_call_operand.vmem [shape: f32[1,64], index: 6, kind: output, shape index: {2}]
  %s7 = inlined_call_operand.vmem [shape: f32[1,64], index: 7, kind: output, shape index: {3}]
  %s8 = inlined_call_operand.vmem [shape: f32[1,32], index: 8, kind: output, shape index: {4}]
  %s9 = inlined_call_operand.vmem [shape: f32[1,32], index: 9, kind: output, shape index: {5}]
  %10 = xla_tuple %s4, %s5, %s6, %s7, %s8, %s9
  %s11 = sld [smem:[#allocation0]]
  $region93: #{_lambda_.2} parent=0
    _
  %s13 = ssub.s32 1, %s11
  %s14 = scalar_select 0, %s13, %s11
  loop: start=0, step=1, limit=4
  $region2: #{_lambda_.2} parent=0 // loop_pre_header
    _
  $region3: #{_lambda_.2} parent=0 // loop_header
    %s16 = sphi 0, %s20
    %p17 = scmp.ge.s32.totalorder %s16, 4
    %s23 = sphi 0, %s35
    %s24 = sphi 0, %s31
    %s25 = sphi 0, %s23
    %s26 = sphi 0, %s24
    %s27 = sphi 0, %s25
    %s28 = sphi 0, %s26
    %s38 = sphi 0, %s40
    %s41 = sphi 0, %s38
    %s42 = sphi 0, %s41
    %s58 = sphi 0, %s42
    %s66 = sphi 0, %s68
    %s69 = sphi 0, %s66
    %s70 = sphi 0, %s69
    %s86 = sphi 0, %s70
    %s90 = sphi 0, %s90
    %s92 = sphi 0, %s90
    %s93 = sphi 0, %s92
    %s107 = sphi 0, %s93
    %s111 = sphi 0, %s111
    %s113 = sphi 0, %s111
    %s114 = sphi 0, %s113
    %s128 = sphi 0, %s114
    %s136 = sphi 0, %s138
    %s139 = sphi 0, %s136
    %s140 = sphi 0, %s139
    %s156 = sphi 0, %s140
    %s164 = sphi 0, %s166
    %s167 = sphi 0, %s164
    %s168 = sphi 0, %s167
    %s184 = sphi 0, %s168
    %s188 = sphi 0, %s188
    %s190 = sphi 0, %s188
    %s191 = sphi 0, %s190
    %s205 = sphi 0, %s191
    %s209 = sphi 0, %s209
    %s211 = sphi 0, %s209
    %s212 = sphi 0, %s211
    %s226 = sphi 0, %s212
    %s230 = sphi 0, %s230
    %s232 = sphi 0, %s230
    %s233 = sphi 0, %s232
    %s247 = sphi 0, %s233
    %s251 = sphi 0, %s251
    %s253 = sphi 0, %s251
    %s254 = sphi 0, %s253
    %s268 = sphi 0, %s254
  $region4: #{_lambda_.2} parent=0 // loop_header_branch
    %19 = sbr.rel (%p17) target = $region8
  $region5: #{_lambda_.2} parent=0 // loop_body
    %s21 = ssub.s32 %s16, 1
    %s22 = ssub.s32 %s16, 2
    %s29 = sadd.s32 1, %s24
    %p30 = scmp.ge.s32.totalorder %s29, 1
    %s31 = scalar_select %p30, 0, %s29
    %s32 = sadd.s32 1, %s23
    %s33 = scalar_select %p30, %s32, %s23
    %p34 = scmp.ge.s32.totalorder %s33, 2
    %s35 = scalar_select %p34, 0, %s33
    %s36 = ssub.s32 %s23, %s35
    %p37 = scmp.eq.s32.totalorder %s36, 0
    %s39 = sadd.s32 %s38, 1
    %s40 = scalar_select %p37, %s38, %s39
    %p43 = pneg %p37
    %p44 = scmp.eq.s32.totalorder %s16, 1
    %p45 = por %p43, %p44
    %p46 = scmp.ne.s32.totalorder %s38, %s41
    %p47 = scmp.eq.s32.totalorder %s16, 0
    %p48 = por %p46, %p47
    %p49 = scmp.ne.s32.totalorder %s38, %s41
    %p50 = scmp.eq.s32.totalorder %s21, 1
    %p51 = por %p49, %p50
    %p52 = scmp.ne.s32.totalorder %s41, %s42
    %p53 = scmp.eq.s32.totalorder %s21, 0
    %p54 = por %p52, %p53
    %p55 = scmp.ne.s32.totalorder %s41, %s42
    %p56 = scmp.eq.s32.totalorder %s22, 1
    %p57 = por %p55, %p56
    %p59 = scmp.ne.s32.totalorder %s42, %s58
    %p60 = scmp.eq.s32.totalorder %s22, 0
    %p61 = por %p59, %p60
    %s62 = sadd.s32 %s23, %s24
    %s63 = sadd.s32 %s35, %s31
    %s64 = ssub.s32 %s62, %s63
    %p65 = scmp.eq.s32.totalorder %s64, 0
    %s67 = sadd.s32 %s66, 1
    %s68 = scalar_select %p65, %s66, %s67
    %p71 = pneg %p65
    %p72 = scmp.eq.s32.totalorder %s16, 1
    %p73 = por %p71, %p72
    %p74 = scmp.ne.s32.totalorder %s66, %s69
    %p75 = scmp.eq.s32.totalorder %s16, 0
    %p76 = por %p74, %p75
    %p77 = scmp.ne.s32.totalorder %s66, %s69
    %p78 = scmp.eq.s32.totalorder %s21, 1
    %p79 = por %p77, %p78
    %p80 = scmp.ne.s32.totalorder %s69, %s70
    %p81 = scmp.eq.s32.totalorder %s21, 0
    %p82 = por %p80, %p81
    %p83 = scmp.ne.s32.totalorder %s69, %s70
    %p84 = scmp.eq.s32.totalorder %s22, 1
    %p85 = por %p83, %p84
    %p87 = scmp.ne.s32.totalorder %s70, %s86
    %p88 = scmp.eq.s32.totalorder %s22, 0
    %p89 = por %p87, %p88
    %s91 = sadd.s32 %s90, 1
    %p94 = scmp.eq.s32.totalorder %s16, 1
    %p95 = scmp.ne.s32.totalorder %s90, %s92
    %p96 = scmp.eq.s32.totalorder %s16, 0
    %p97 = por %p95, %p96
    %p98 = scmp.ne.s32.totalorder %s90, %s92
    %p99 = scmp.eq.s32.totalorder %s21, 1
    %p100 = por %p98, %p99
    %p101 = scmp.ne.s32.totalorder %s92, %s93
    %p102 = scmp.eq.s32.totalorder %s21, 0
    %p103 = por %p101, %p102
    %p104 = scmp.ne.s32.totalorder %s92, %s93
    %p105 = scmp.eq.s32.totalorder %s22, 1
    %p106 = por %p104, %p105
    %p108 = scmp.ne.s32.totalorder %s93, %s107
    %p109 = scmp.eq.s32.totalorder %s22, 0
    %p110 = por %p108, %p109
    %s112 = sadd.s32 %s111, 1
    %p115 = scmp.eq.s32.totalorder %s16, 1
    %p116 = scmp.ne.s32.totalorder %s111, %s113
    %p117 = scmp.eq.s32.totalorder %s16, 0
    %p118 = por %p116, %p117
    %p119 = scmp.ne.s32.totalorder %s111, %s113
    %p120 = scmp.eq.s32.totalorder %s21, 1
    %p121 = por %p119, %p120
    %p122 = scmp.ne.s32.totalorder %s113, %s114
    %p123 = scmp.eq.s32.totalorder %s21, 0
    %p124 = por %p122, %p123
    %p125 = scmp.ne.s32.totalorder %s113, %s114
    %p126 = scmp.eq.s32.totalorder %s22, 1
    %p127 = por %p125, %p126
    %p129 = scmp.ne.s32.totalorder %s114, %s128
    %p130 = scmp.eq.s32.totalorder %s22, 0
    %p131 = por %p129, %p130
    %s132 = sadd.s32 %s23, %s24
    %s133 = sadd.s32 %s35, %s31
    %s134 = ssub.s32 %s132, %s133
    %p135 = scmp.eq.s32.totalorder %s134, 0
    %s137 = sadd.s32 %s136, 1
    %s138 = scalar_select %p135, %s136, %s137
    %p141 = pneg %p135
    %p142 = scmp.eq.s32.totalorder %s16, 1
    %p143 = por %p141, %p142
    %p144 = scmp.ne.s32.totalorder %s136, %s139
    %p145 = scmp.eq.s32.totalorder %s16, 0
    %p146 = por %p144, %p145
    %p147 = scmp.ne.s32.totalorder %s136, %s139
    %p148 = scmp.eq.s32.totalorder %s21, 1
    %p149 = por %p147, %p148
    %p150 = scmp.ne.s32.totalorder %s139, %s140
    %p151 = scmp.eq.s32.totalorder %s21, 0
    %p152 = por %p150, %p151
    %p153 = scmp.ne.s32.totalorder %s139, %s140
    %p154 = scmp.eq.s32.totalorder %s22, 1
    %p155 = por %p153, %p154
    %p157 = scmp.ne.s32.totalorder %s140, %s156
    %p158 = scmp.eq.s32.totalorder %s22, 0
    %p159 = por %p157, %p158
    %s160 = sadd.s32 %s23, %s24
    %s161 = sadd.s32 %s35, %s31
    %s162 = ssub.s32 %s160, %s161
    %p163 = scmp.eq.s32.totalorder %s162, 0
    %s165 = sadd.s32 %s164, 1
    %s166 = scalar_select %p163, %s164, %s165
    %p169 = pneg %p163
    %p170 = scmp.eq.s32.totalorder %s16, 1
    %p171 = por %p169, %p170
    %p172 = scmp.ne.s32.totalorder %s164, %s167
    %p173 = scmp.eq.s32.totalorder %s16, 0
    %p174 = por %p172, %p173
    %p175 = scmp.ne.s32.totalorder %s164, %s167
    %p176 = scmp.eq.s32.totalorder %s21, 1
    %p177 = por %p175, %p176
    %p178 = scmp.ne.s32.totalorder %s167, %s168
    %p179 = scmp.eq.s32.totalorder %s21, 0
    %p180 = por %p178, %p179
    %p181 = scmp.ne.s32.totalorder %s167, %s168
    %p182 = scmp.eq.s32.totalorder %s22, 1
    %p183 = por %p181, %p182
    %p185 = scmp.ne.s32.totalorder %s168, %s184
    %p186 = scmp.eq.s32.totalorder %s22, 0
    %p187 = por %p185, %p186
    %s189 = sadd.s32 %s188, 1
    %p192 = scmp.eq.s32.totalorder %s16, 1
    %p193 = scmp.ne.s32.totalorder %s188, %s190
    %p194 = scmp.eq.s32.totalorder %s16, 0
    %p195 = por %p193, %p194
    %p196 = scmp.ne.s32.totalorder %s188, %s190
    %p197 = scmp.eq.s32.totalorder %s21, 1
    %p198 = por %p196, %p197
    %p199 = scmp.ne.s32.totalorder %s190, %s191
    %p200 = scmp.eq.s32.totalorder %s21, 0
    %p201 = por %p199, %p200
    %p202 = scmp.ne.s32.totalorder %s190, %s191
    %p203 = scmp.eq.s32.totalorder %s22, 1
    %p204 = por %p202, %p203
    %p206 = scmp.ne.s32.totalorder %s191, %s205
    %p207 = scmp.eq.s32.totalorder %s22, 0
    %p208 = por %p206, %p207
    %s210 = sadd.s32 %s209, 1
    %p213 = scmp.eq.s32.totalorder %s16, 1
    %p214 = scmp.ne.s32.totalorder %s209, %s211
    %p215 = scmp.eq.s32.totalorder %s16, 0
    %p216 = por %p214, %p215
    %p217 = scmp.ne.s32.totalorder %s209, %s211
    %p218 = scmp.eq.s32.totalorder %s21, 1
    %p219 = por %p217, %p218
    %p220 = scmp.ne.s32.totalorder %s211, %s212
    %p221 = scmp.eq.s32.totalorder %s21, 0
    %p222 = por %p220, %p221
    %p223 = scmp.ne.s32.totalorder %s211, %s212
    %p224 = scmp.eq.s32.totalorder %s22, 1
    %p225 = por %p223, %p224
    %p227 = scmp.ne.s32.totalorder %s212, %s226
    %p228 = scmp.eq.s32.totalorder %s22, 0
    %p229 = por %p227, %p228
    %s231 = sadd.s32 %s230, 1
    %p234 = scmp.eq.s32.totalorder %s16, 1
    %p235 = scmp.ne.s32.totalorder %s230, %s232
    %p236 = scmp.eq.s32.totalorder %s16, 0
    %p237 = por %p235, %p236
    %p238 = scmp.ne.s32.totalorder %s230, %s232
    %p239 = scmp.eq.s32.totalorder %s21, 1
    %p240 = por %p238, %p239
    %p241 = scmp.ne.s32.totalorder %s232, %s233
    %p242 = scmp.eq.s32.totalorder %s21, 0
    %p243 = por %p241, %p242
    %p244 = scmp.ne.s32.totalorder %s232, %s233
    %p245 = scmp.eq.s32.totalorder %s22, 1
    %p246 = por %p244, %p245
    %p248 = scmp.ne.s32.totalorder %s233, %s247
    %p249 = scmp.eq.s32.totalorder %s22, 0
    %p250 = por %p248, %p249
    %s252 = sadd.s32 %s251, 1
    %p255 = scmp.eq.s32.totalorder %s16, 1
    %p256 = scmp.ne.s32.totalorder %s251, %s253
    %p257 = scmp.eq.s32.totalorder %s16, 0
    %p258 = por %p256, %p257
    %p259 = scmp.ne.s32.totalorder %s251, %s253
    %p260 = scmp.eq.s32.totalorder %s21, 1
    %p261 = por %p259, %p260
    %p262 = scmp.ne.s32.totalorder %s253, %s254
    %p263 = scmp.eq.s32.totalorder %s21, 0
    %p264 = por %p262, %p263
    %p265 = scmp.ne.s32.totalorder %s253, %s254
    %p266 = scmp.eq.s32.totalorder %s22, 1
    %p267 = por %p265, %p266
    %p269 = scmp.ne.s32.totalorder %s254, %s268
    %p270 = scmp.eq.s32.totalorder %s22, 0
    %p271 = por %p269, %p270
    %p272 = scmp.le.s32.totalorder 1, %s16
    %p273 = scmp.lt.s32.totalorder %s16, 3
    %p274 = pnand %p272, %p273
    %p275 = pneg %p274
    // Predicated region
    $region9: #{_lambda_.2} parent=5 // pred_check
      _
    $region10: #{_lambda_.2} parent=5 // pred_check_branch
      %277 = sbr.rel (%p274) target = $region12
    $region11: #{_lambda_.2} parent=5 // pred_region
      %s278 = ssub.s32 %s16, 1
      // Predicated region
      $region13: #{_lambda_.2} parent=11 // pred_check
        %p279 = pneg %p103
      $region14: #{_lambda_.2} parent=11 // pred_check_branch
        %281 = sbr.rel (%p279) target = $region16
      $region15: #{_lambda_.2} parent=11 // pred_region
        _
      $region16: #{_lambda_.2} parent=11 // pred_fallthru
        _
      // Predicated region
      $region17: #{_lambda_.2} parent=11 // pred_check
        %p282 = pneg %p124
      $region18: #{_lambda_.2} parent=11 // pred_check_branch
        %284 = sbr.rel (%p282) target = $region20
      $region19: #{_lambda_.2} parent=11 // pred_region
        _
      $region20: #{_lambda_.2} parent=11 // pred_fallthru
        _
    $region12: #{_lambda_.2} parent=5 // pred_fallthru
      _
    %p285 = scmp.lt.s32.totalorder %s16, 2
    // Predicated region
    $region21: #{_lambda_.2} parent=5 // pred_check
      %p286 = pneg %p285
    $region22: #{_lambda_.2} parent=5 // pred_check_branch
      %288 = sbr.rel (%p286) target = $region24
    $region23: #{_lambda_.2} parent=5 // pred_region
      // Predicated region
      $region25: #{_lambda_.2} parent=23 // pred_check
        %p289 = pneg %p48
      $region26: #{_lambda_.2} parent=23 // pred_check_branch
        %291 = sbr.rel (%p289) target = $region28
      $region27: #{_lambda_.2} parent=23 // pred_region
        %p292 = scmp.lt.s32.totalorder %s23, 1
        %s293 = scalar_select %p292, %s23, 1
        %s294 = smul.addr %s293, 18
        %s295 = smul.addr %s294, 8
        %s296 = scalar_lea.vmem %s0, %s295
      $region28: #{_lambda_.2} parent=23 // pred_fallthru
        _
      // Predicated region
      $region29: #{_lambda_.2} parent=23 // pred_check
        %p297 = pneg %p76
      $region30: #{_lambda_.2} parent=23 // pred_check_branch
        %299 = sbr.rel (%p297) target = $region32
      $region31: #{_lambda_.2} parent=23 // pred_region
        %s300 = sadd.s32 %s23, %s24
        %s301 = smul.u32 8, %s300
        %p302 = scmp.lt.s32.totalorder %s301, 15
        %s303 = scalar_select %p302, %s301, 15
        %s304 = smul.addr %s303, 8
        %s305 = scalar_lea.vmem %s1, %s304
        %s306 = sadd.s32 %s23, %s24
        %s307 = smul.u32 8, %s306
      $region32: #{_lambda_.2} parent=23 // pred_fallthru
        _
    $region24: #{_lambda_.2} parent=5 // pred_fallthru
      _
    %p308 = scmp.le.s32.totalorder 1, %s16
    %p309 = scmp.lt.s32.totalorder %s16, 3
    %p310 = pnand %p308, %p309
    %p311 = pneg %p310
    // Predicated region
    $region33: #{_lambda_.2} parent=5 // pred_check
      _
    $region34: #{_lambda_.2} parent=5 // pred_check_branch
      %313 = sbr.rel (%p310) target = $region36
    $region35: #{_lambda_.2} parent=5 // pred_region
      %s314 = ssub.s32 %s16, 1
      %p315 = scmp.lt.s32.totalorder %s25, 1
      %s316 = scalar_select %p315, %s25, 1
      %s317 = smul.addr %s316, 18
      %s318 = smul.addr %s317, 8
      %s319 = scalar_lea.vmem %s0, %s318
      %p320 = pneg %p54
      %p321 = pneg %p51
      %s322 = sadd.s32 %s25, %s26
      %s323 = smul.u32 8, %s322
      %p324 = scmp.lt.s32.totalorder %s323, 15
      %s325 = scalar_select %p324, %s323, 15
      %s326 = smul.addr %s325, 8
      %s327 = scalar_lea.vmem %s1, %s326
      %p328 = pneg %p82
      %p329 = pneg %p79
      %p330 = pneg %p103
      %p331 = pneg %p100
      %p332 = pneg %p124
      %p333 = pneg %p121
      %p334 = pneg %p152
      %p335 = pneg %p149
      %s336 = sadd.s32 %s25, %s26
      %s337 = smul.u32 8, %s336
      %p338 = scmp.lt.s32.totalorder %s337, 15
      %s339 = scalar_select %p338, %s337, 15
      %s340 = smul.addr %s339, 8
      %s341 = scalar_lea.vmem %s4, %s340
      %p342 = pneg %p180
      %p343 = pneg %p177
      %s344 = sadd.s32 %s25, %s26
      %s345 = smul.u32 8, %s344
      %p346 = scmp.lt.s32.totalorder %s345, 15
      %s347 = scalar_select %p346, %s345, 15
      %s348 = smul.addr %s347, 8
      %s349 = scalar_lea.vmem %s5, %s348
      %p350 = pneg %p201
      %p351 = pneg %p198
      %p352 = pneg %p222
      %p353 = pneg %p219
      %p354 = pneg %p243
      %p355 = pneg %p240
      %p356 = pneg %p264
      %p357 = pneg %p261
      %p358 = scmp.lt.s32.totalorder %s25, 1
      %s359 = scalar_select %p358, %s25, 1
      %s360 = smul.addr %s359, 18
      %s361 = smul.addr %s360, 8
      %s362 = scalar_lea.vmem %s0, %s361
      %s363 = sadd.s32 %s25, %s26
      %s364 = smul.u32 8, %s363
      %p365 = scmp.lt.s32.totalorder %s364, 15
      %s366 = scalar_select %p365, %s364, 15
      %s367 = smul.addr %s366, 8
      %s368 = scalar_lea.vmem %s1, %s367
      %s369 = sadd.s32 %s25, %s26
      %s370 = smul.u32 8, %s369
      %s371 = sadd.s32 %s25, %s26
      %s372 = smul.u32 8, %s371
      %p373 = scmp.lt.s32.totalorder %s372, 15
      %s374 = scalar_select %p373, %s372, 15
      %s375 = smul.addr %s374, 8
      %s376 = scalar_lea.vmem %s4, %s375
      %s377 = sadd.s32 %s25, %s26
      %s378 = smul.u32 8, %s377
      %s379 = sadd.s32 %s25, %s26
      %s380 = smul.u32 8, %s379
      %p381 = scmp.lt.s32.totalorder %s380, 15
      %s382 = scalar_select %p381, %s380, 15
      %s383 = smul.addr %s382, 8
      %s384 = scalar_lea.vmem %s5, %s383
      %s385 = sadd.s32 %s25, %s26
      %s386 = smul.u32 8, %s385
      %p388 = scmp.eq.s32.totalorder %s25, 0
      %p389 = scmp.eq.s32.totalorder %s26, 0
      %p390 = pnand %p388, %p389
      %p391 = pneg %p390
      // Predicated region
      $region37: #{_lambda_.2} parent=35 // pred_check
        _
      $region38: #{_lambda_.2} parent=35 // pred_check_branch
        %393 = sbr.rel (%p390) target = $region40
      $region39: #{_lambda_.2} parent=35 // pred_region
        %vm394 = vcmask 516096
        %395 = vst.msk [vmem:[%s6] sm:$0x1] %vm394, 0.0
        %396 = vst.msk [vmem:[%s7] sm:$0x1] %vm394, 0.0
        %vm397 = vcmask 253952
        %398 = vst.msk [vmem:[%s8] sm:$0x1] %vm397, 0.0
        %399 = vst.msk [vmem:[%s9] sm:$0x1] %vm397, 0.0
      $region40: #{_lambda_.2} parent=35 // pred_fallthru
        _
      %s400 = smul.u32 %s26, 8
      %s401 = smul.u32 %s400, 16
      %s402 = scalar_lea.vmem %s362, %s401
      %v403 = vld [vmem:[%s402] sm:$0xff]
      %v404 = vld [vmem:[%s402 + $0x10] sm:$0xff]
      %v405 = vld [vmem:[%s402 + $0x20] sm:$0xff]
      %v406 = vld [vmem:[%s402 + $0x30] sm:$0xff]
      %v407 = vld [vmem:[%s402 + $0x40] sm:$0xff]
      %v408 = vld [vmem:[%s402 + $0x50] sm:$0xff]
      %v409 = vld [vmem:[%s402 + $0x60] sm:$0xff]
      %v410 = vld [vmem:[%s402 + $0x70] sm:$0xff]
      %v411 = vpack.c.bf16 %v404, %v403
      %v412 = vpack.c.bf16 %v406, %v405
      %v413 = vpack.c.bf16 %v408, %v407
      %v414 = vpack.c.bf16 %v410, %v409
      %v415 = vld [vmem:[%s2] sm:$0xf]
      %v416 = vld [vmem:[%s2 + $0x4] sm:$0xf]
      %v417 = vld [vmem:[%s2 + $0x8] sm:$0xf]
      %v418 = vld [vmem:[%s2 + $0xc] sm:$0xf]
      %v419 = vld [vmem:[%s2 + $0x10] sm:$0xf]
      %v420 = vld [vmem:[%s2 + $0x14] sm:$0xf]
      %v421 = vld [vmem:[%s2 + $0x18] sm:$0xf]
      %v422 = vld [vmem:[%s2 + $0x1c] sm:$0xf]
      %v423 = vld [vmem:[%s2 + $0x20] sm:$0xf]
      %v424 = vld [vmem:[%s2 + $0x24] sm:$0xf]
      %v425 = vld [vmem:[%s2 + $0x28] sm:$0xf]
      %v426 = vld [vmem:[%s2 + $0x2c] sm:$0xf]
      %v427 = vld [vmem:[%s2 + $0x30] sm:$0xf]
      %v428 = vld [vmem:[%s2 + $0x34] sm:$0xf]
      %v429 = vld [vmem:[%s2 + $0x38] sm:$0xf]
      %v430 = vld [vmem:[%s2 + $0x3c] sm:$0xf]
      %v431 = vld [vmem:[%s402 + $0x1] sm:$0xff]
      %v432 = vld [vmem:[%s402 + $0x11] sm:$0xff]
      %v433 = vld [vmem:[%s402 + $0x21] sm:$0xff]
      %v434 = vld [vmem:[%s402 + $0x31] sm:$0xff]
      %v435 = vld [vmem:[%s402 + $0x41] sm:$0xff]
      %v436 = vld [vmem:[%s402 + $0x51] sm:$0xff]
      %v437 = vld [vmem:[%s402 + $0x61] sm:$0xff]
      %v438 = vld [vmem:[%s402 + $0x71] sm:$0xff]
      %v439 = vpack.c.bf16 %v432, %v431
      %v440 = vpack.c.bf16 %v434, %v433
      %v441 = vpack.c.bf16 %v436, %v435
      %v442 = vpack.c.bf16 %v438, %v437
      %s443 = scalar_lea.vmem %s2, 64
      %v444 = vld [vmem:[%s443] sm:$0xf]
      %v445 = vld [vmem:[%s443 + $0x4] sm:$0xf]
      %v446 = vld [vmem:[%s443 + $0x8] sm:$0xf]
      %v447 = vld [vmem:[%s443 + $0xc] sm:$0xf]
      %v448 = vld [vmem:[%s443 + $0x10] sm:$0xf]
      %v449 = vld [vmem:[%s443 + $0x14] sm:$0xf]
      %v450 = vld [vmem:[%s443 + $0x18] sm:$0xf]
      %v451 = vld [vmem:[%s443 + $0x1c] sm:$0xf]
      %v452 = vld [vmem:[%s443 + $0x20] sm:$0xf]
      %v453 = vld [vmem:[%s443 + $0x24] sm:$0xf]
      %v454 = vld [vmem:[%s443 + $0x28] sm:$0xf]
      %v455 = vld [vmem:[%s443 + $0x2c] sm:$0xf]
      %v456 = vld [vmem:[%s443 + $0x30] sm:$0xf]
      %v457 = vld [vmem:[%s443 + $0x34] sm:$0xf]
      %v458 = vld [vmem:[%s443 + $0x38] sm:$0xf]
      %v459 = vld [vmem:[%s443 + $0x3c] sm:$0xf]
      %v476 = vunpack.c.l.b16 %v444
      %v477 = vunpack.c.l.b16 %v445
      %v478 = vunpack.c.l.b16 %v446
      %v479 = vunpack.c.l.b16 %v447
      %v480 = vunpack.c.l.b16 %v448
      %v481 = vunpack.c.l.b16 %v449
      %v482 = vunpack.c.l.b16 %v450
      %v483 = vunpack.c.l.b16 %v451
      %v484 = vunpack.c.l.b16 %v452
      %v485 = vunpack.c.l.b16 %v453
      %v486 = vunpack.c.l.b16 %v454
      %v487 = vunpack.c.l.b16 %v455
      %v488 = vunpack.c.l.b16 %v456
      %v489 = vunpack.c.l.b16 %v457
      %v490 = vunpack.c.l.b16 %v458
      %v491 = vunpack.c.l.b16 %v459
      %v492 = vpack.c.b16 %v477, %v476
      %v493 = vpack.c.b16 %v479, %v478
      %v494 = vpack.c.b16 %v481, %v480
      %v495 = vpack.c.b16 %v483, %v482
      %v496 = vpack.c.b16 %v485, %v484
      %v497 = vpack.c.b16 %v487, %v486
      %v498 = vpack.c.b16 %v489, %v488
      %v499 = vpack.c.b16 %v491, %v490
      %508 = vmatprep.subr.bf16.mxu0 0
      %509 = vmatpush1.bf16.msra.mxu0 %v492
      %510 = vmatprep.subr.bf16.mxu0 0
      %511 = vmatpush1.bf16.msra.mxu0 %v493
      %512 = vmatprep.subr.bf16.mxu0 0
      %513 = vmatpush1.bf16.msra.mxu0 %v494
      %514 = vmatprep.subr.bf16.mxu0 0
      %515 = vmatpush1.bf16.msra.mxu0 %v495
      %516 = vmatprep.subr.bf16.mxu0 0
      %517 = vmatpush1.bf16.msra.mxu0 %v496
      %518 = vmatprep.subr.bf16.mxu0 0
      %519 = vmatpush1.bf16.msra.mxu0 %v497
      %520 = vmatprep.subr.bf16.mxu0 0
      %521 = vmatpush1.bf16.msra.mxu0 %v498
      %522 = vmatprep.subr.bf16.mxu0 0
      %523 = vmatpush1.bf16.msra.mxu0 %v499
      %524 = vmatprep.subr.bf16.mxu0 0
      %525 = vmatpush1.bf16.msra.mxu0 0
      %526 = vmatprep.subr.bf16.mxu0 0
      %527 = vmatpush1.bf16.msra.mxu0 0
      %528 = vmatprep.subr.bf16.mxu0 0
      %529 = vmatpush1.bf16.msra.mxu0 0
      %530 = vmatprep.subr.bf16.mxu0 0
      %531 = vmatpush1.bf16.msra.mxu0 0
      %532 = vmatprep.subr.bf16.mxu0 0
      %533 = vmatpush1.bf16.msra.mxu0 0
      %534 = vmatprep.subr.bf16.mxu0 0
      %535 = vmatpush1.bf16.msra.mxu0 0
      %536 = vmatprep.subr.bf16.mxu0 0
      %537 = vmatpush1.bf16.msra.mxu0 0
      %538 = vmatprep.subr.bf16.mxu0 0
      %539 = vmatpush1.bf16.msra.mxu0 0
      %540 = vmatprep.mubr.bf16.mxu0 0
      %541 = vmatmul.mubr.bf16.gmra.mrb[0].mxu0 %v439
      %v542 = vpop.f32.mrb[0].mxu0
      %v543 = vadd.f32 0.0, %v542
      %v544 = vpop.f32.mrb[0].mxu0
      %v545 = vpop.f32.mrb[0].mxu0
      %v546 = vadd.f32 0.0, %v545
      %v547 = vpop.f32.mrb[0].mxu0
      %548 = vmatprep.mubr.bf16.mxu0 0
      %549 = vmatmul.mubr.bf16.gmra.mrb[0].mxu0 %v440
      %v550 = vpop.f32.mrb[0].mxu0
      %v551 = vadd.f32 0.0, %v550
      %v552 = vpop.f32.mrb[0].mxu0
      %v553 = vpop.f32.mrb[0].mxu0
      %v554 = vadd.f32 0.0, %v553
      %v555 = vpop.f32.mrb[0].mxu0
      %556 = vmatprep.mubr.bf16.mxu0 0
      %557 = vmatmul.mubr.bf16.gmra.mrb[0].mxu0 %v441
      %v558 = vpop.f32.mrb[0].mxu0
      %v559 = vadd.f32 0.0, %v558
      %v560 = vpop.f32.mrb[0].mxu0
      %v561 = vpop.f32.mrb[0].mxu0
      %v562 = vadd.f32 0.0, %v561
      %v563 = vpop.f32.mrb[0].mxu0
      %564 = vmatprep.mubr.bf16.mxu0 0
      %565 = vmatmul.mubr.bf16.gmra.mrb[0].mxu0 %v442
      %v566 = vpop.f32.mrb[0].mxu0
      %v567 = vadd.f32 0.0, %v566
      %v568 = vpop.f32.mrb[0].mxu0
      %v569 = vpop.f32.mrb[0].mxu0
      %v570 = vadd.f32 0.0, %v569
      %v571 = vpop.f32.mrb[0].mxu0
      %572 = vdwg.mxu0
      %v589 = vunpack.c.l.b16 %v415
      %v590 = vunpack.c.l.b16 %v416
      %v591 = vunpack.c.l.b16 %v417
      %v592 = vunpack.c.l.b16 %v418
      %v593 = vunpack.c.l.b16 %v419
      %v594 = vunpack.c.l.b16 %v420
      %v595 = vunpack.c.l.b16 %v421
      %v596 = vunpack.c.l.b16 %v422
      %v597 = vunpack.c.l.b16 %v423
      %v598 = vunpack.c.l.b16 %v424
      %v599 = vunpack.c.l.b16 %v425
      %v600 = vunpack.c.l.b16 %v426
      %v601 = vunpack.c.l.b16 %v427
      %v602 = vunpack.c.l.b16 %v428
      %v603 = vunpack.c.l.b16 %v429
      %v604 = vunpack.c.l.b16 %v430
      %v605 = vpack.c.b16 %v590, %v589
      %v606 = vpack.c.b16 %v592, %v591
      %v607 = vpack.c.b16 %v594, %v593
      %v608 = vpack.c.b16 %v596, %v595
      %v609 = vpack.c.b16 %v598, %v597
      %v610 = vpack.c.b16 %v600, %v599
      %v611 = vpack.c.b16 %v602, %v601
      %v612 = vpack.c.b16 %v604, %v603
      %621 = vmatprep.subr.bf16.mxu0 0
      %622 = vmatpush1.bf16.msra.mxu0 %v605
      %623 = vmatprep.subr.bf16.mxu0 0
      %624 = vmatpush1.bf16.msra.mxu0 %v606
      %625 = vmatprep.subr.bf16.mxu0 0
      %626 = vmatpush1.bf16.msra.mxu0 %v607
      %627 = vmatprep.subr.bf16.mxu0 0
      %628 = vmatpush1.bf16.msra.mxu0 %v608
      %629 = vmatprep.subr.bf16.mxu0 0
      %630 = vmatpush1.bf16.msra.mxu0 %v609
      %631 = vmatprep.subr.bf16.mxu0 0
      %632 = vmatpush1.bf16.msra.mxu0 %v610
      %633 = vmatprep.subr.bf16.mxu0 0
      %634 = vmatpush1.bf16.msra.mxu0 %v611
      %635 = vmatprep.subr.bf16.mxu0 0
      %636 = vmatpush1.bf16.msra.mxu0 %v612
      %637 = vmatprep.subr.bf16.mxu0 0
      %638 = vmatpush1.bf16.msra.mxu0 0
      %639 = vmatprep.subr.bf16.mxu0 0
      %640 = vmatpush1.bf16.msra.mxu0 0
      %641 = vmatprep.subr.bf16.mxu0 0
      %642 = vmatpush1.bf16.msra.mxu0 0
      %643 = vmatprep.subr.bf16.mxu0 0
      %644 = vmatpush1.bf16.msra.mxu0 0
      %645 = vmatprep.subr.bf16.mxu0 0
      %646 = vmatpush1.bf16.msra.mxu0 0
      %647 = vmatprep.subr.bf16.mxu0 0
      %648 = vmatpush1.bf16.msra.mxu0 0
      %649 = vmatprep.subr.bf16.mxu0 0
      %650 = vmatpush1.bf16.msra.mxu0 0
      %651 = vmatprep.subr.bf16.mxu0 0
      %652 = vmatpush1.bf16.msra.mxu0 0
      %653 = vmatprep.mubr.bf16.mxu0 0
      %654 = vmatmul.mubr.bf16.gmra.mrb[0].mxu0 %v411
      %v655 = vpop.f32.mrb[0].mxu0
      %v656 = vadd.f32 %v543, %v655
      %v657 = vpop.f32.mrb[0].mxu0
      %v658 = vpop.f32.mrb[0].mxu0
      %v659 = vadd.f32 %v546, %v658
      %v660 = vpop.f32.mrb[0].mxu0
      %661 = vmatprep.mubr.bf16.mxu0 0
      %662 = vmatmul.mubr.bf16.gmra.mrb[0].mxu0 %v412
      %v663 = vpop.f32.mrb[0].mxu0
      %v664 = vadd.f32 %v551, %v663
      %v665 = vpop.f32.mrb[0].mxu0
      %v666 = vpop.f32.mrb[0].mxu0
      %v667 = vadd.f32 %v554, %v666
      %v668 = vpop.f32.mrb[0].mxu0
      %669 = vmatprep.mubr.bf16.mxu0 0
      %670 = vmatmul.mubr.bf16.gmra.mrb[0].mxu0 %v413
      %v671 = vpop.f32.mrb[0].mxu0
      %v672 = vadd.f32 %v559, %v671
      %v673 = vpop.f32.mrb[0].mxu0
      %v674 = vpop.f32.mrb[0].mxu0
      %v675 = vadd.f32 %v562, %v674
      %v676 = vpop.f32.mrb[0].mxu0
      %677 = vmatprep.mubr.bf16.mxu0 0
      %678 = vmatmul.mubr.bf16.gmra.mrb[0].mxu0 %v414
      %v679 = vpop.f32.mrb[0].mxu0
      %v680 = vadd.f32 %v567, %v679
      %v681 = vpop.f32.mrb[0].mxu0
      %v682 = vpop.f32.mrb[0].mxu0
      %v683 = vadd.f32 %v570, %v682
      %v684 = vpop.f32.mrb[0].mxu0
      %685 = vdwg.mxu0
      %s686 = sadd.s32 %s400, 1
      %s687 = smul.u32 %s686, 16
      %s688 = scalar_lea.vmem %s362, %s687
      %v689 = vld [vmem:[%s688] sm:$0xff]
      %v690 = vld [vmem:[%s688 + $0x10] sm:$0xff]
      %v691 = vld [vmem:[%s688 + $0x20] sm:$0xff]
      %v692 = vld [vmem:[%s688 + $0x30] sm:$0xff]
      %v693 = vld [vmem:[%s688 + $0x40] sm:$0xff]
      %v694 = vld [vmem:[%s688 + $0x50] sm:$0xff]
      %v695 = vld [vmem:[%s688 + $0x60] sm:$0xff]
      %v696 = vld [vmem:[%s688 + $0x70] sm:$0xff]
      %v697 = vpack.c.bf16 %v690, %v689
      %v698 = vpack.c.bf16 %v692, %v691
      %v699 = vpack.c.bf16 %v694, %v693
      %v700 = vpack.c.bf16 %v696, %v695
      %s701 = scalar_lea.vmem %s2, 128
      %v702 = vld [vmem:[%s701] sm:$0xf]
      %v703 = vld [vmem:[%s701 + $0x4] sm:$0xf]
      %v704 = vld [vmem:[%s701 + $0x8] sm:$0xf]
      %v705 = vld [vmem:[%s701 + $0xc] sm:$0xf]
      %v706 = vld [vmem:[%s701 + $0x10] sm:$0xf]
      %v707 = vld [vmem:[%s701 + $0x14] sm:$0xf]
      %v708 = vld [vmem:[%s701 + $0x18] sm:$0xf]
      %v709 = vld [vmem:[%s701 + $0x1c] sm:$0xf]
      %v710 = vld [vmem:[%s701 + $0x20] sm:$0xf]
      %v711 = vld [vmem:[%s701 + $0x24] sm:$0xf]
      %v712 = vld [vmem:[%s701 + $0x28] sm:$0xf]
      %v713 = vld [vmem:[%s701 + $0x2c] sm:$0xf]
      %v714 = vld [vmem:[%s701 + $0x30] sm:$0xf]
      %v715 = vld [vmem:[%s701 + $0x34] sm:$0xf]
      %v716 = vld [vmem:[%s701 + $0x38] sm:$0xf]
      %v717 = vld [vmem:[%s701 + $0x3c] sm:$0xf]
      %v734 = vunpack.c.l.b16 %v702
      %v735 = vunpack.c.l.b16 %v703
      %v736 = vunpack.c.l.b16 %v704
      %v737 = vunpack.c.l.b16 %v705
      %v738 = vunpack.c.l.b16 %v706
      %v739 = vunpack.c.l.b16 %v707
      %v740 = vunpack.c.l.b16 %v708
      %v741 = vunpack.c.l.b16 %v709
      %v742 = vunpack.c.l.b16 %v710
      %v743 = vunpack.c.l.b16 %v711
      %v744 = vunpack.c.l.b16 %v712
      %v745 = vunpack.c.l.b16 %v713
      %v746 = vunpack.c.l.b16 %v714
      %v747 = vunpack.c.l.b16 %v715
      %v748 = vunpack.c.l.b16 %v716
      %v749 = vunpack.c.l.b16 %v717
      %v750 = vpack.c.b16 %v735, %v734
      %v751 = vpack.c.b16 %v737, %v736
      %v752 = vpack.c.b16 %v739, %v738
      %v753 = vpack.c.b16 %v741, %v740
      %v754 = vpack.c.b16 %v743, %v742
      %v755 = vpack.c.b16 %v745, %v744
      %v756 = vpack.c.b16 %v747, %v746
      %v757 = vpack.c.b16 %v749, %v748
      %766 = vmatprep.subr.bf16.mxu0 0
      %767 = vmatpush1.bf16.msra.mxu0 %v750
      %768 = vmatprep.subr.bf16.mxu0 0
      %769 = vmatpush1.bf16.msra.mxu0 %v751
      %770 = vmatprep.subr.bf16.mxu0 0
      %771 = vmatpush1.bf16.msra.mxu0 %v752
      %772 = vmatprep.subr.bf16.mxu0 0
      %773 = vmatpush1.bf16.msra.mxu0 %v753
      %774 = vmatprep.subr.bf16.mxu0 0
      %775 = vmatpush1.bf16.msra.mxu0 %v754
      %776 = vmatprep.subr.bf16.mxu0 0
      %777 = vmatpush1.bf16.msra.mxu0 %v755
      %778 = vmatprep.subr.bf16.mxu0 0
      %779 = vmatpush1.bf16.msra.mxu0 %v756
      %780 = vmatprep.subr.bf16.mxu0 0
      %781 = vmatpush1.bf16.msra.mxu0 %v757
      %782 = vmatprep.subr.bf16.mxu0 0
      %783 = vmatpush1.bf16.msra.mxu0 0
      %784 = vmatprep.subr.bf16.mxu0 0
      %785 = vmatpush1.bf16.msra.mxu0 0
      %786 = vmatprep.subr.bf16.mxu0 0
      %787 = vmatpush1.bf16.msra.mxu0 0
      %788 = vmatprep.subr.bf16.mxu0 0
      %789 = vmatpush1.bf16.msra.mxu0 0
      %790 = vmatprep.subr.bf16.mxu0 0
      %791 = vmatpush1.bf16.msra.mxu0 0
      %792 = vmatprep.subr.bf16.mxu0 0
      %793 = vmatpush1.bf16.msra.mxu0 0
      %794 = vmatprep.subr.bf16.mxu0 0
      %795 = vmatpush1.bf16.msra.mxu0 0
      %796 = vmatprep.subr.bf16.mxu0 0
      %797 = vmatpush1.bf16.msra.mxu0 0
      %798 = vmatprep.mubr.bf16.mxu0 0
      %799 = vmatmul.mubr.bf16.gmra.mrb[0].mxu0 %v697
      %v800 = vpop.f32.mrb[0].mxu0
      %v801 = vadd.f32 0.0, %v800
      %v802 = vpop.f32.mrb[0].mxu0
      %v803 = vpop.f32.mrb[0].mxu0
      %v804 = vadd.f32 0.0, %v803
      %v805 = vpop.f32.mrb[0].mxu0
      %806 = vmatprep.mubr.bf16.mxu0 0
      %807 = vmatmul.mubr.bf16.gmra.mrb[0].mxu0 %v698
      %v808 = vpop.f32.mrb[0].mxu0
      %v809 = vadd.f32 0.0, %v808
      %v810 = vpop.f32.mrb[0].mxu0
      %v811 = vpop.f32.mrb[0].mxu0
      %v812 = vadd.f32 0.0, %v811
      %v813 = vpop.f32.mrb[0].mxu0
      %814 = vmatprep.mubr.bf16.mxu0 0
      %815 = vmatmul.mubr.bf16.gmra.mrb[0].mxu0 %v699
      %v816 = vpop.f32.mrb[0].mxu0
      %v817 = vadd.f32 0.0, %v816
      %v818 = vpop.f32.mrb[0].mxu0
      %v819 = vpop.f32.mrb[0].mxu0
      %v820 = vadd.f32 0.0, %v819
      %v821 = vpop.f32.mrb[0].mxu0
      %822 = vmatprep.mubr.bf16.mxu0 0
      %823 = vmatmul.mubr.bf16.gmra.mrb[0].mxu0 %v700
      %v824 = vpop.f32.mrb[0].mxu0
      %v825 = vadd.f32 0.0, %v824
      %v826 = vpop.f32.mrb[0].mxu0
      %v827 = vpop.f32.mrb[0].mxu0
      %v828 = vadd.f32 0.0, %v827
      %v829 = vpop.f32.mrb[0].mxu0
      %830 = vdwg.mxu0
      %v831 = vadd.f32 %v656, %v801
      %v832 = vadd.f32 %v659, %v804
      %v833 = vadd.f32 %v664, %v809
      %v834 = vadd.f32 %v667, %v812
      %v835 = vadd.f32 %v672, %v817
      %v836 = vadd.f32 %v675, %v820
      %v837 = vadd.f32 %v680, %v825
      %v838 = vadd.f32 %v683, %v828
      %v839 = vld [vmem:[%s688 + $0x1] sm:$0xff]
      %v840 = vld [vmem:[%s688 + $0x11] sm:$0xff]
      %v841 = vld [vmem:[%s688 + $0x21] sm:$0xff]
      %v842 = vld [vmem:[%s688 + $0x31] sm:$0xff]
      %v843 = vld [vmem:[%s688 + $0x41] sm:$0xff]
      %v844 = vld [vmem:[%s688 + $0x51] sm:$0xff]
      %v845 = vld [vmem:[%s688 + $0x61] sm:$0xff]
      %v846 = vld [vmem:[%s688 + $0x71] sm:$0xff]
      %v847 = vpack.c.bf16 %v840, %v839
      %v848 = vpack.c.bf16 %v842, %v841
      %v849 = vpack.c.bf16 %v844, %v843
      %v850 = vpack.c.bf16 %v846, %v845
      %s851 = scalar_lea.vmem %s2, 192
      %v852 = vld [vmem:[%s851] sm:$0xf]
      %v853 = vld [vmem:[%s851 + $0x4] sm:$0xf]
      %v854 = vld [vmem:[%s851 + $0x8] sm:$0xf]
      %v855 = vld [vmem:[%s851 + $0xc] sm:$0xf]
      %v856 = vld [vmem:[%s851 + $0x10] sm:$0xf]
      %v857 = vld [vmem:[%s851 + $0x14] sm:$0xf]
      %v858 = vld [vmem:[%s851 + $0x18] sm:$0xf]
      %v859 = vld [vmem:[%s851 + $0x1c] sm:$0xf]
      %v860 = vld [vmem:[%s851 + $0x20] sm:$0xf]
      %v861 = vld [vmem:[%s851 + $0x24] sm:$0xf]
      %v862 = vld [vmem:[%s851 + $0x28] sm:$0xf]
      %v863 = vld [vmem:[%s851 + $0x2c] sm:$0xf]
      %v864 = vld [vmem:[%s851 + $0x30] sm:$0xf]
      %v865 = vld [vmem:[%s851 + $0x34] sm:$0xf]
      %v866 = vld [vmem:[%s851 + $0x38] sm:$0xf]
      %v867 = vld [vmem:[%s851 + $0x3c] sm:$0xf]
      %v884 = vunpack.c.l.b16 %v852
      %v885 = vunpack.c.l.b16 %v853
      %v886 = vunpack.c.l.b16 %v854
      %v887 = vunpack.c.l.b16 %v855
      %v888 = vunpack.c.l.b16 %v856
      %v889 = vunpack.c.l.b16 %v857
      %v890 = vunpack.c.l.b16 %v858
      %v891 = vunpack.c.l.b16 %v859
      %v892 = vunpack.c.l.b16 %v860
      %v893 = vunpack.c.l.b16 %v861
      %v894 = vunpack.c.l.b16 %v862
      %v895 = vunpack.c.l.b16 %v863
      %v896 = vunpack.c.l.b16 %v864
      %v897 = vunpack.c.l.b16 %v865
      %v898 = vunpack.c.l.b16 %v866
      %v899 = vunpack.c.l.b16 %v867
      %v900 = vpack.c.b16 %v885, %v884
      %v901 = vpack.c.b16 %v887, %v886
      %v902 = vpack.c.b16 %v889, %v888
      %v903 = vpack.c.b16 %v891, %v890
      %v904 = vpack.c.b16 %v893, %v892
      %v905 = vpack.c.b16 %v895, %v894
      %v906 = vpack.c.b16 %v897, %v896
      %v907 = vpack.c.b16 %v899, %v898
      %916 = vmatprep.subr.bf16.mxu0 0
      %917 = vmatpush1.bf16.msra.mxu0 %v900
      %918 = vmatprep.subr.bf16.mxu0 0
      %919 = vmatpush1.bf16.msra.mxu0 %v901
      %920 = vmatprep.subr.bf16.mxu0 0
      %921 = vmatpush1.bf16.msra.mxu0 %v902
      %922 = vmatprep.subr.bf16.mxu0 0
      %923 = vmatpush1.bf16.msra.mxu0 %v903
      %924 = vmatprep.subr.bf16.mxu0 0
      %925 = vmatpush1.bf16.msra.mxu0 %v904
      %926 = vmatprep.subr.bf16.mxu0 0
      %927 = vmatpush1.bf16.msra.mxu0 %v905
      %928 = vmatprep.subr.bf16.mxu0 0
      %929 = vmatpush1.bf16.msra.mxu0 %v906
      %930 = vmatprep.subr.bf16.mxu0 0
      %931 = vmatpush1.bf16.msra.mxu0 %v907
      %932 = vmatprep.subr.bf16.mxu0 0
      %933 = vmatpush1.bf16.msra.mxu0 0
      %934 = vmatprep.subr.bf16.mxu0 0
      %935 = vmatpush1.bf16.msra.mxu0 0
      %936 = vmatprep.subr.bf16.mxu0 0
      %937 = vmatpush1.bf16.msra.mxu0 0
      %938 = vmatprep.subr.bf16.mxu0 0
      %939 = vmatpush1.bf16.msra.mxu0 0
      %940 = vmatprep.subr.bf16.mxu0 0
      %941 = vmatpush1.bf16.msra.mxu0 0
      %942 = vmatprep.subr.bf16.mxu0 0
      %943 = vmatpush1.bf16.msra.mxu0 0
      %944 = vmatprep.subr.bf16.mxu0 0
      %945 = vmatpush1.bf16.msra.mxu0 0
      %946 = vmatprep.subr.bf16.mxu0 0
      %947 = vmatpush1.bf16.msra.mxu0 0
      %948 = vmatprep.mubr.bf16.mxu0 0
      %949 = vmatmul.mubr.bf16.gmra.mrb[0].mxu0 %v847
      %v950 = vpop.f32.mrb[0].mxu0
      %v951 = vadd.f32 0.0, %v950
      %v952 = vpop.f32.mrb[0].mxu0
      %v953 = vpop.f32.mrb[0].mxu0
      %v954 = vadd.f32 0.0, %v953
      %v955 = vpop.f32.mrb[0].mxu0
      %956 = vmatprep.mubr.bf16.mxu0 0
      %957 = vmatmul.mubr.bf16.gmra.mrb[0].mxu0 %v848
      %v958 = vpop.f32.mrb[0].mxu0
      %v959 = vadd.f32 0.0, %v958
      %v960 = vpop.f32.mrb[0].mxu0
      %v961 = vpop.f32.mrb[0].mxu0
      %v962 = vadd.f32 0.0, %v961
      %v963 = vpop.f32.mrb[0].mxu0
      %964 = vmatprep.mubr.bf16.mxu0 0
      %965 = vmatmul.mubr.bf16.gmra.mrb[0].mxu0 %v849
      %v966 = vpop.f32.mrb[0].mxu0
      %v967 = vadd.f32 0.0, %v966
      %v968 = vpop.f32.mrb[0].mxu0
      %v969 = vpop.f32.mrb[0].mxu0
      %v970 = vadd.f32 0.0, %v969
      %v971 = vpop.f32.mrb[0].mxu0
      %972 = vmatprep.mubr.bf16.mxu0 0
      %973 = vmatmul.mubr.bf16.gmra.mrb[0].mxu0 %v850
      %v974 = vpop.f32.mrb[0].mxu0
      %v975 = vadd.f32 0.0, %v974
      %v976 = vpop.f32.mrb[0].mxu0
      %v977 = vpop.f32.mrb[0].mxu0
      %v978 = vadd.f32 0.0, %v977
      %v979 = vpop.f32.mrb[0].mxu0
      %980 = vdwg.mxu0
      %v981 = vadd.f32 %v831, %v951
      %v982 = vadd.f32 %v832, %v954
      %v983 = vadd.f32 %v833, %v959
      %v984 = vadd.f32 %v834, %v962
      %v985 = vadd.f32 %v835, %v967
      %v986 = vadd.f32 %v836, %v970
      %v987 = vadd.f32 %v837, %v975
      %v988 = vadd.f32 %v838, %v978
      %vm989 = vcmask 523264
      %990 = vst.msk [vmem:[%s376] sm:$0xff] %vm989, %v981
      %991 = vst.msk [vmem:[%s376 + $0x8] sm:$0xff] %vm989, %v982
      %992 = vst.msk [vmem:[%s376 + $0x10] sm:$0xff] %vm989, %v983
      %993 = vst.msk [vmem:[%s376 + $0x18] sm:$0xff] %vm989, %v984
      %994 = vst.msk [vmem:[%s376 + $0x20] sm:$0xff] %vm989, %v985
      %995 = vst.msk [vmem:[%s376 + $0x28] sm:$0xff] %vm989, %v986
      %996 = vst.msk [vmem:[%s376 + $0x30] sm:$0xff] %vm989, %v987
      %997 = vst.msk [vmem:[%s376 + $0x38] sm:$0xff] %vm989, %v988
      %v998 = vld [vmem:[%s368] sm:$0xff]
      %v999 = vld [vmem:[%s368 + $0x8] sm:$0xff]
      %v1000 = vld [vmem:[%s368 + $0x10] sm:$0xff]
      %v1001 = vld [vmem:[%s368 + $0x18] sm:$0xff]
      %v1002 = vld [vmem:[%s368 + $0x20] sm:$0xff]
      %v1003 = vld [vmem:[%s368 + $0x28] sm:$0xff]
      %v1004 = vld [vmem:[%s368 + $0x30] sm:$0xff]
      %v1005 = vld [vmem:[%s368 + $0x38] sm:$0xff]
      %v1006 = vpack.c.bf16 %v999, %v998
      %v1007 = vpack.c.bf16 %v1001, %v1000
      %v1008 = vpack.c.bf16 %v1003, %v1002
      %v1009 = vpack.c.bf16 %v1005, %v1004
      %v1010 = vld [vmem:[%s3] sm:$0xf]
      %v1011 = vld [vmem:[%s3 + $0x4] sm:$0xf]
      %v1012 = vld [vmem:[%s3 + $0x8] sm:$0xf]
      %v1013 = vld [vmem:[%s3 + $0xc] sm:$0xf]
      %v1014 = vld [vmem:[%s3 + $0x10] sm:$0xf]
      %v1015 = vld [vmem:[%s3 + $0x14] sm:$0xf]
      %v1016 = vld [vmem:[%s3 + $0x18] sm:$0xf]
      %v1017 = vld [vmem:[%s3 + $0x1c] sm:$0xf]
      %v1026 = vunpack.c.l.b16 %v1010
      %v1027 = vunpack.c.l.b16 %v1011
      %v1028 = vunpack.c.l.b16 %v1012
      %v1029 = vunpack.c.l.b16 %v1013
      %v1030 = vunpack.c.l.b16 %v1014
      %v1031 = vunpack.c.l.b16 %v1015
      %v1032 = vunpack.c.l.b16 %v1016
      %v1033 = vunpack.c.l.b16 %v1017
      %v1034 = vpack.c.b16 %v1027, %v1026
      %v1035 = vpack.c.b16 %v1029, %v1028
      %v1036 = vpack.c.b16 %v1031, %v1030
      %v1037 = vpack.c.b16 %v1033, %v1032
      %v1043 = vsel %vm989, %v1006, 0
      %v1046 = vsel %vm989, %v1007, 0
      %v1049 = vsel %vm989, %v1008, 0
      %v1052 = vsel %vm989, %v1009, 0
      %1054 = vmatprep.subr.bf16.mxu0 0
      %1055 = vmatpush1.bf16.msra.mxu0 %v1034
      %1056 = vmatprep.subr.bf16.mxu0 0
      %1057 = vmatpush1.bf16.msra.mxu0 %v1035
      %1058 = vmatprep.subr.bf16.mxu0 0
      %1059 = vmatpush1.bf16.msra.mxu0 %v1036
      %1060 = vmatprep.subr.bf16.mxu0 0
      %1061 = vmatpush1.bf16.msra.mxu0 %v1037
      %1062 = vmatprep.subr.bf16.mxu0 0
      %1063 = vmatpush1.bf16.msra.mxu0 0
      %1064 = vmatprep.subr.bf16.mxu0 0
      %1065 = vmatpush1.bf16.msra.mxu0 0
      %1066 = vmatprep.subr.bf16.mxu0 0
      %1067 = vmatpush1.bf16.msra.mxu0 0
      %1068 = vmatprep.subr.bf16.mxu0 0
      %1069 = vmatpush1.bf16.msra.mxu0 0
      %1070 = vmatprep.subr.bf16.mxu0 0
      %1071 = vmatpush1.bf16.msra.mxu0 0
      %1072 = vmatprep.subr.bf16.mxu0 0
      %1073 = vmatpush1.bf16.msra.mxu0 0
      %1074 = vmatprep.subr.bf16.mxu0 0
      %1075 = vmatpush1.bf16.msra.mxu0 0
      %1076 = vmatprep.subr.bf16.mxu0 0
      %1077 = vmatpush1.bf16.msra.mxu0 0
      %1078 = vmatprep.subr.bf16.mxu0 0
      %1079 = vmatpush1.bf16.msra.mxu0 0
      %1080 = vmatprep.subr.bf16.mxu0 0
      %1081 = vmatpush1.bf16.msra.mxu0 0
      %1082 = vmatprep.subr.bf16.mxu0 0
      %1083 = vmatpush1.bf16.msra.mxu0 0
      %1084 = vmatprep.subr.bf16.mxu0 0
      %1085 = vmatpush1.bf16.msra.mxu0 0
      %1086 = vmatprep.mubr.bf16.mxu0 0
      %1087 = vmatmul.mubr.bf16.gmra.mrb[0].mxu0 %v1043
      %v1088 = vpop.f32.mrb[0].mxu0
      %v1089 = vadd.f32 0.0, %v1088
      %v1090 = vpop.f32.mrb[0].mxu0
      %v1091 = vpop.f32.mrb[0].mxu0
      %v1092 = vadd.f32 0.0, %v1091
      %v1093 = vpop.f32.mrb[0].mxu0
      %1094 = vmatprep.mubr.bf16.mxu0 0
      %1095 = vmatmul.mubr.bf16.gmra.mrb[0].mxu0 %v1046
      %v1096 = vpop.f32.mrb[0].mxu0
      %v1097 = vadd.f32 0.0, %v1096
      %v1098 = vpop.f32.mrb[0].mxu0
      %v1099 = vpop.f32.mrb[0].mxu0
      %v1100 = vadd.f32 0.0, %v1099
      %v1101 = vpop.f32.mrb[0].mxu0
      %1102 = vmatprep.mubr.bf16.mxu0 0
      %1103 = vmatmul.mubr.bf16.gmra.mrb[0].mxu0 %v1049
      %v1104 = vpop.f32.mrb[0].mxu0
      %v1105 = vadd.f32 0.0, %v1104
      %v1106 = vpop.f32.mrb[0].mxu0
      %v1107 = vpop.f32.mrb[0].mxu0
      %v1108 = vadd.f32 0.0, %v1107
      %v1109 = vpop.f32.mrb[0].mxu0
      %1110 = vmatprep.mubr.bf16.mxu0 0
      %1111 = vmatmul.mubr.bf16.gmra.mrb[0].mxu0 %v1052
      %v1112 = vpop.f32.mrb[0].mxu0
      %v1113 = vadd.f32 0.0, %v1112
      %v1114 = vpop.f32.mrb[0].mxu0
      %v1115 = vpop.f32.mrb[0].mxu0
      %v1116 = vadd.f32 0.0, %v1115
      %v1117 = vpop.f32.mrb[0].mxu0
      %1118 = vdwg.mxu0
      %vm1119 = vcmask 261120
      %1120 = vst.msk [vmem:[%s384] sm:$0xff] %vm1119, %v1089
      %1121 = vst.msk [vmem:[%s384 + $0x8] sm:$0xff] %vm1119, %v1092
      %1122 = vst.msk [vmem:[%s384 + $0x10] sm:$0xff] %vm1119, %v1097
      %1123 = vst.msk [vmem:[%s384 + $0x18] sm:$0xff] %vm1119, %v1100
      %1124 = vst.msk [vmem:[%s384 + $0x20] sm:$0xff] %vm1119, %v1105
      %1125 = vst.msk [vmem:[%s384 + $0x28] sm:$0xff] %vm1119, %v1108
      %1126 = vst.msk [vmem:[%s384 + $0x30] sm:$0xff] %vm1119, %v1113
      %1127 = vst.msk [vmem:[%s384 + $0x38] sm:$0xff] %vm1119, %v1116
      %v1128 = vld [vmem:[%s6] sm:$0x1]
      %v1129 = vsel %vm989, %v981, 0.0
      %v1130 = vsel %vm989, %v982, 0.0
      %v1131 = vadd.f32 %v1129, %v1130
      %v1132 = vsel %vm989, %v983, 0.0
      %v1133 = vadd.f32 %v1131, %v1132
      %v1134 = vsel %vm989, %v984, 0.0
      %v1135 = vadd.f32 %v1133, %v1134
      %v1136 = vsel %vm989, %v985, 0.0
      %v1137 = vadd.f32 %v1135, %v1136
      %v1138 = vsel %vm989, %v986, 0.0
      %v1139 = vadd.f32 %v1137, %v1138
      %v1140 = vsel %vm989, %v987, 0.0
      %v1141 = vadd.f32 %v1139, %v1140
      %v1142 = vsel %vm989, %v988, 0.0
      %v1143 = vadd.f32 %v1141, %v1142
      %v1144 = vrot.slane %v1143, 4
      %v1145 = vadd.f32 %v1143, %v1144
      %v1146 = vrot.slane %v1145, 2
      %v1147 = vadd.f32 %v1145, %v1146
      %v1148 = vrot.slane %v1147, 1
      %v1149 = vadd.f32 %v1147, %v1148
      %v1150 = vadd.f32 %v1128, %v1149
      %vm1151 = vcmask 516096
      %1152 = vst.msk [vmem:[%s6] sm:$0x1] %vm1151, %v1150
      %v1153 = vld [vmem:[%s7] sm:$0x1]
      %v1154 = vmul.f32 %v981, %v981
      %v1155 = vmul.f32 %v982, %v982
      %v1156 = vmul.f32 %v983, %v983
      %v1157 = vmul.f32 %v984, %v984
      %v1158 = vmul.f32 %v985, %v985
      %v1159 = vmul.f32 %v986, %v986
      %v1160 = vmul.f32 %v987, %v987
      %v1161 = vmul.f32 %v988, %v988
      %v1162 = vsel %vm989, %v1154, 0.0
      %v1163 = vsel %vm989, %v1155, 0.0
      %v1164 = vadd.f32 %v1162, %v1163
      %v1165 = vsel %vm989, %v1156, 0.0
      %v1166 = vadd.f32 %v1164, %v1165
      %v1167 = vsel %vm989, %v1157, 0.0
      %v1168 = vadd.f32 %v1166, %v1167
      %v1169 = vsel %vm989, %v1158, 0.0
      %v1170 = vadd.f32 %v1168, %v1169
      %v1171 = vsel %vm989, %v1159, 0.0
      %v1172 = vadd.f32 %v1170, %v1171
      %v1173 = vsel %vm989, %v1160, 0.0
      %v1174 = vadd.f32 %v1172, %v1173
      %v1175 = vsel %vm989, %v1161, 0.0
      %v1176 = vadd.f32 %v1174, %v1175
      %v1177 = vrot.slane %v1176, 4
      %v1178 = vadd.f32 %v1176, %v1177
      %v1179 = vrot.slane %v1178, 2
      %v1180 = vadd.f32 %v1178, %v1179
      %v1181 = vrot.slane %v1180, 1
      %v1182 = vadd.f32 %v1180, %v1181
      %v1183 = vadd.f32 %v1153, %v1182
      %1184 = vst.msk [vmem:[%s7] sm:$0x1] %vm1151, %v1183
      %v1185 = vld [vmem:[%s8] sm:$0x1]
      %v1186 = vsel %vm1119, %v1089, 0.0
      %v1187 = vsel %vm1119, %v1092, 0.0
      %v1188 = vadd.f32 %v1186, %v1187
      %v1189 = vsel %vm1119, %v1097, 0.0
      %v1190 = vadd.f32 %v1188, %v1189
      %v1191 = vsel %vm1119, %v1100, 0.0
      %v1192 = vadd.f32 %v1190, %v1191
      %v1193 = vsel %vm1119, %v1105, 0.0
      %v1194 = vadd.f32 %v1192, %v1193
      %v1195 = vsel %vm1119, %v1108, 0.0
      %v1196 = vadd.f32 %v1194, %v1195
      %v1197 = vsel %vm1119, %v1113, 0.0
      %v1198 = vadd.f32 %v1196, %v1197
      %v1199 = vsel %vm1119, %v1116, 0.0
      %v1200 = vadd.f32 %v1198, %v1199
      %v1201 = vrot.slane %v1200, 4
      %v1202 = vadd.f32 %v1200, %v1201
      %v1203 = vrot.slane %v1202, 2
      %v1204 = vadd.f32 %v1202, %v1203
      %v1205 = vrot.slane %v1204, 1
      %v1206 = vadd.f32 %v1204, %v1205
      %v1207 = vadd.f32 %v1185, %v1206
      %vm1208 = vcmask 253952
      %1209 = vst.msk [vmem:[%s8] sm:$0x1] %vm1208, %v1207
      %v1210 = vld [vmem:[%s9] sm:$0x1]
      %v1211 = vmul.f32 %v1089, %v1089
      %v1212 = vmul.f32 %v1092, %v1092
      %v1213 = vmul.f32 %v1097, %v1097
      %v1214 = vmul.f32 %v1100, %v1100
      %v1215 = vmul.f32 %v1105, %v1105
      %v1216 = vmul.f32 %v1108, %v1108
      %v1217 = vmul.f32 %v1113, %v1113
      %v1218 = vmul.f32 %v1116, %v1116
      %v1219 = vsel %vm1119, %v1211, 0.0
      %v1220 = vsel %vm1119, %v1212, 0.0
      %v1221 = vadd.f32 %v1219, %v1220
      %v1222 = vsel %vm1119, %v1213, 0.0
      %v1223 = vadd.f32 %v1221, %v1222
      %v1224 = vsel %vm1119, %v1214, 0.0
      %v1225 = vadd.f32 %v1223, %v1224
      %v1226 = vsel %vm1119, %v1215, 0.0
      %v1227 = vadd.f32 %v1225, %v1226
      %v1228 = vsel %vm1119, %v1216, 0.0
      %v1229 = vadd.f32 %v1227, %v1228
      %v1230 = vsel %vm1119, %v1217, 0.0
      %v1231 = vadd.f32 %v1229, %v1230
      %v1232 = vsel %vm1119, %v1218, 0.0
      %v1233 = vadd.f32 %v1231, %v1232
      %v1234 = vrot.slane %v1233, 4
      %v1235 = vadd.f32 %v1233, %v1234
      %v1236 = vrot.slane %v1235, 2
      %v1237 = vadd.f32 %v1235, %v1236
      %v1238 = vrot.slane %v1237, 1
      %v1239 = vadd.f32 %v1237, %v1238
      %v1240 = vadd.f32 %v1210, %v1239
      %1241 = vst.msk [vmem:[%s9] sm:$0x1] %vm1208, %v1240
      %s1242 = sadd.s32 %s25, %s26
      %s1243 = smul.u32 8, %s1242
      %p1244 = scmp.lt.s32.totalorder %s1243, 15
      %s1245 = scalar_select %p1244, %s1243, 15
      %s1246 = smul.addr %s1245, 8
      %s1247 = scalar_lea.vmem %s4, %s1246
      %s1248 = sadd.s32 %s25, %s26
      %s1249 = smul.u32 8, %s1248
      %p1250 = scmp.lt.s32.totalorder %s1249, 15
      %s1251 = scalar_select %p1250, %s1249, 15
      %s1252 = smul.addr %s1251, 8
      %s1253 = scalar_lea.vmem %s5, %s1252
      // Predicated region
      $region41: #{_lambda_.2} parent=35 // pred_check
        %p1254 = pneg %p149
      $region42: #{_lambda_.2} parent=35 // pred_check_branch
        %1256 = sbr.rel (%p1254) target = $region44
      $region43: #{_lambda_.2} parent=35 // pred_region
        %s1257 = sadd.s32 %s25, %s26
        %s1258 = smul.u32 8, %s1257
      $region44: #{_lambda_.2} parent=35 // pred_fallthru
        _
      // Predicated region
      $region45: #{_lambda_.2} parent=35 // pred_check
        %p1259 = pneg %p177
      $region46: #{_lambda_.2} parent=35 // pred_check_branch
        %1261 = sbr.rel (%p1259) target = $region48
      $region47: #{_lambda_.2} parent=35 // pred_region
        %s1262 = sadd.s32 %s25, %s26
        %s1263 = smul.u32 8, %s1262
      $region48: #{_lambda_.2} parent=35 // pred_fallthru
        _
      // Predicated region
      $region49: #{_lambda_.2} parent=35 // pred_check
        %p1264 = pneg %p198
      $region50: #{_lambda_.2} parent=35 // pred_check_branch
        %1266 = sbr.rel (%p1264) target = $region52
      $region51: #{_lambda_.2} parent=35 // pred_region
        _
      $region52: #{_lambda_.2} parent=35 // pred_fallthru
        _
      // Predicated region
      $region53: #{_lambda_.2} parent=35 // pred_check
        %p1267 = pneg %p219
      $region54: #{_lambda_.2} parent=35 // pred_check_branch
        %1269 = sbr.rel (%p1267) target = $region56
      $region55: #{_lambda_.2} parent=35 // pred_region
        _
      $region56: #{_lambda_.2} parent=35 // pred_fallthru
        _
      // Predicated region
      $region57: #{_lambda_.2} parent=35 // pred_check
        %p1270 = pneg %p240
      $region58: #{_lambda_.2} parent=35 // pred_check_branch
        %1272 = sbr.rel (%p1270) target = $region60
      $region59: #{_lambda_.2} parent=35 // pred_region
        _
      $region60: #{_lambda_.2} parent=35 // pred_fallthru
        _
      // Predicated region
      $region61: #{_lambda_.2} parent=35 // pred_check
        %p1273 = pneg %p261
      $region62: #{_lambda_.2} parent=35 // pred_check_branch
        %1275 = sbr.rel (%p1273) target = $region64
      $region63: #{_lambda_.2} parent=35 // pred_region
        _
      $region64: #{_lambda_.2} parent=35 // pred_fallthru
        _
      // Predicated region
      $region65: #{_lambda_.2} parent=35 // pred_check
        %p1276 = pneg %p198
      $region66: #{_lambda_.2} parent=35 // pred_check_branch
        %1278 = sbr.rel (%p1276) target = $region68
      $region67: #{_lambda_.2} parent=35 // pred_region
        _
      $region68: #{_lambda_.2} parent=35 // pred_fallthru
        _
      // Predicated region
      $region69: #{_lambda_.2} parent=35 // pred_check
        %p1279 = pneg %p219
      $region70: #{_lambda_.2} parent=35 // pred_check_branch
        %1281 = sbr.rel (%p1279) target = $region72
      $region71: #{_lambda_.2} parent=35 // pred_region
        _
      $region72: #{_lambda_.2} parent=35 // pred_fallthru
        _
      // Predicated region
      $region73: #{_lambda_.2} parent=35 // pred_check
        %p1282 = pneg %p240
      $region74: #{_lambda_.2} parent=35 // pred_check_branch
        %1284 = sbr.rel (%p1282) target = $region76
      $region75: #{_lambda_.2} parent=35 // pred_region
        _
      $region76: #{_lambda_.2} parent=35 // pred_fallthru
        _
      // Predicated region
      $region77: #{_lambda_.2} parent=35 // pred_check
        %p1285 = pneg %p261
      $region78: #{_lambda_.2} parent=35 // pred_check_branch
        %1287 = sbr.rel (%p1285) target = $region80
      $region79: #{_lambda_.2} parent=35 // pred_region
        _
      $region80: #{_lambda_.2} parent=35 // pred_fallthru
        _
    $region36: #{_lambda_.2} parent=5 // pred_fallthru
      _
    %p1288 = scmp.le.s32.totalorder 2, %s16
    // Predicated region
    $region81: #{_lambda_.2} parent=5 // pred_check
      %p1289 = pneg %p1288
    $region82: #{_lambda_.2} parent=5 // pred_check_branch
      %1291 = sbr.rel (%p1289) target = $region84
    $region83: #{_lambda_.2} parent=5 // pred_region
      %s1292 = ssub.s32 %s16, 2
      // Predicated region
      $region85: #{_lambda_.2} parent=83 // pred_check
        %p1293 = pneg %p155
      $region86: #{_lambda_.2} parent=83 // pred_check_branch
        %1295 = sbr.rel (%p1293) target = $region88
      $region87: #{_lambda_.2} parent=83 // pred_region
        %s1296 = sadd.s32 %s27, %s28
        %s1297 = smul.u32 8, %s1296
        %p1298 = scmp.lt.s32.totalorder %s1297, 15
        %s1299 = scalar_select %p1298, %s1297, 15
        %s1300 = smul.addr %s1299, 8
        %s1301 = scalar_lea.vmem %s4, %s1300
      $region88: #{_lambda_.2} parent=83 // pred_fallthru
        _
      // Predicated region
      $region89: #{_lambda_.2} parent=83 // pred_check
        %p1302 = pneg %p183
      $region90: #{_lambda_.2} parent=83 // pred_check_branch
        %1304 = sbr.rel (%p1302) target = $region92
      $region91: #{_lambda_.2} parent=83 // pred_region
        %s1305 = sadd.s32 %s27, %s28
        %s1306 = smul.u32 8, %s1305
        %p1307 = scmp.lt.s32.totalorder %s1306, 15
        %s1308 = scalar_select %p1307, %s1306, 15
        %s1309 = smul.addr %s1308, 8
        %s1310 = scalar_lea.vmem %s5, %s1309
      $region92: #{_lambda_.2} parent=83 // pred_fallthru
        _
    $region84: #{_lambda_.2} parent=5 // pred_fallthru
      _
  $region6: #{_lambda_.2} parent=0 // loop_footer
    %s20 = sadd.s32 1, %s16
  $region7: #{_lambda_.2} parent=0 // loop_footer_branch
    %15 = sbr.rel target = $region3
  $region8: #{_lambda_.2} parent=0 // loop_exit
    _

</llo_original>
